<compile_context>
chip_gen: v5e
topology: v5e:2x2
jax: 0.10.0
libtpu: 0.0.40
codegen_flags: <defaults>
</compile_context>

<pallas_src>
import math

import jax
import jax.numpy as jnp
from jax.experimental import pallas as pl
from jax.experimental.pallas import tpu as pltpu

D_MODEL = 32
N_HEAD = 4
DIM_FF = 64
NUM_LAYERS = 2
EPS = 1e-5  # PyTorch LayerNorm default eps


def _layer_norm(x, w, b):
    # PyTorch LayerNorm: biased variance over the last dim. w, b are (1, D).
    mu = jnp.mean(x, axis=-1, keepdims=True)
    var = jnp.mean(jnp.square(x - mu), axis=-1, keepdims=True)
    return (x - mu) * jax.lax.rsqrt(var + EPS) * w + b


def encoder_layer_kernel(src_ref, pos_ref,
                         w_qk_ref, b_qk_ref, w_v_ref, b_v_ref,
                         w_out_ref, b_out_ref, ln1_w_ref, ln1_b_ref,
                         w1_ref, b1_ref, w2_ref, b2_ref, ln2_w_ref, ln2_b_ref,
                         out_ref, x_sc):
    """One grid step = one encoder layer applied to one batch row."""
    D = D_MODEL
    H = N_HEAD
    Dh = D // H
    l = pl.program_id(1)

    # Initialize the carried activation from the input on the first layer.
    @pl.when(l == 0)
    def _():
        x_sc[...] = src_ref[0]

    x = x_sc[...]        # (S, D)
    pos = pos_ref[0]     # (S, D)
    qk_in = x + pos      # q = k = with_pos_embed(src, pos); value = src (no pos)

    # Merged Q/K projection (scale already folded into the Q half of the weights).
    qk = jnp.dot(qk_in, w_qk_ref[0],
                 preferred_element_type=jnp.float32) + b_qk_ref[0]      # (S, 2D)
    v = jnp.dot(x, w_v_ref[0],
                preferred_element_type=jnp.float32) + b_v_ref[0]        # (S, D)
    q = qk[:, 0:D]
    k = qk[:, D:2 * D]

    # Multi-head attention: head outputs stay in registers, concatenated in the
    # lane dim, then a single (S,D)@(D,D) output projection.
    # TODO(synk): attn_mask / key_padding_mask not supported (None in this setup).
    heads = []
    for h in range(H):
        lo, hi = h * Dh, (h + 1) * Dh
        qh = q[:, lo:hi]
        kh = k[:, lo:hi]
        vh = v[:, lo:hi]
        s = jax.lax.dot_general(
            qh, kh, (((1,), (1,)), ((), ())),
            preferred_element_type=jnp.float32)                          # (S, S)
        s = s - jnp.max(s, axis=-1, keepdims=True)
        p = jnp.exp(s)
        p = p * pl.reciprocal(jnp.sum(p, axis=-1, keepdims=True), approx=True)
        heads.append(jnp.dot(p, vh, preferred_element_type=jnp.float32))  # (S, Dh)
    attn = jnp.concatenate(heads, axis=-1)                                # (S, D)
    attn = jnp.dot(attn, w_out_ref[0],
                   preferred_element_type=jnp.float32) + b_out_ref[0]     # (S, D)

    # residual + LayerNorm1
    x = _layer_norm(x + attn, ln1_w_ref[0], ln1_b_ref[0])

    # feed-forward: Linear(D->FF) -> ReLU -> Linear(FF->D)
    h1 = jnp.dot(x, w1_ref[0], preferred_element_type=jnp.float32) + b1_ref[0]
    h1 = jnp.maximum(h1, 0.0)
    h2 = jnp.dot(h1, w2_ref[0], preferred_element_type=jnp.float32) + b2_ref[0]

    # residual + LayerNorm2
    x = _layer_norm(x + h2, ln2_w_ref[0], ln2_b_ref[0])

    # Carry to the next layer; emit only after the last layer.
    x_sc[...] = x

    @pl.when(l == pl.num_programs(1) - 1)
    def _():
        out_ref[0] = x


def _stack_layer_weights(layer_params_list):
    """Pre-split / pre-transpose per-layer weights, fold the attention scale into the
    Q projection, and stack along a leading layer dim (streamed per grid step)."""
    D = D_MODEL
    scale = 1.0 / math.sqrt(D // N_HEAD)

    def stk(fn):
        return jnp.stack([fn(p) for p in layer_params_list], axis=0)

    def w_qk(p):
        w_q_T = jnp.transpose(p["w_in"][0:D, :]) * scale       # scale folded into Q
        w_k_T = jnp.transpose(p["w_in"][D:2 * D, :])
        return jnp.concatenate([w_q_T, w_k_T], axis=1)          # (D, 2D)

    def b_qk(p):
        b_q = p["b_in"][0:D] * scale                            # scale folded into Q bias
        b_k = p["b_in"][D:2 * D]
        return jnp.concatenate([b_q, b_k]).reshape(1, -1)        # (1, 2D)

    return [
        stk(w_qk),                                               # w_qk_T  (L, D, 2D)
        stk(b_qk),                                               # b_qk    (L, 1, 2D)
        stk(lambda p: jnp.transpose(p["w_in"][2 * D:3 * D, :])), # w_v_T   (L, D, D)
        stk(lambda p: p["b_in"][2 * D:3 * D].reshape(1, -1)),    # b_v     (L, 1, D)
        stk(lambda p: jnp.transpose(p["w_out"])),                # w_out_T (L, D, D)
        stk(lambda p: p["b_out"].reshape(1, -1)),                # b_out   (L, 1, D)
        stk(lambda p: p["ln1_w"].reshape(1, -1)),                # (L, 1, D)
        stk(lambda p: p["ln1_b"].reshape(1, -1)),
        stk(lambda p: jnp.transpose(p["w1"])),                   # w1_T    (L, D, FF)
        stk(lambda p: p["b1"].reshape(1, -1)),                   # (L, 1, FF)
        stk(lambda p: jnp.transpose(p["w2"])),                   # w2_T    (L, FF, D)
        stk(lambda p: p["b2"].reshape(1, -1)),
        stk(lambda p: p["ln2_w"].reshape(1, -1)),
        stk(lambda p: p["ln2_b"].reshape(1, -1)),
    ]


def transformer_encoder_pallas(x_bsd, pos_bsd, stacked_weights):
    B, S, D = x_bsd.shape
    L = stacked_weights[0].shape[0]

    in_specs = [
        # src / pos: constant over the layer axis -> DMA'd once per batch row.
        pl.BlockSpec((1, S, D), lambda b, l: (b, 0, 0)),
        pl.BlockSpec((1, S, D), lambda b, l: (b, 0, 0)),
    ] + [
        # Per-layer weight slabs streamed along the (inner) layer grid axis; the
        # default double-buffering prefetches layer l+1 weights under layer-l compute.
        pl.BlockSpec((1,) + w.shape[1:], lambda b, l: (l, 0, 0))
        for w in stacked_weights
    ]
    # Output block is resident across the layer axis; written on the last layer only.
    out_spec = pl.BlockSpec((1, S, D), lambda b, l: (b, 0, 0))

    grid_spec = pltpu.PrefetchScalarGridSpec(
        num_scalar_prefetch=0,
        grid=(B, L),
        in_specs=in_specs,
        out_specs=out_spec,
        scratch_shapes=[pltpu.VMEM((S, D), jnp.float32)],   # layer-to-layer carry
    )
    return pl.pallas_call(
        encoder_layer_kernel,
        out_shape=jax.ShapeDtypeStruct((B, S, D), jnp.float32),
        grid_spec=grid_spec,
        compiler_params=pltpu.CompilerParams(
            dimension_semantics=("parallel", "arbitrary")),
    )(x_bsd, pos_bsd, *stacked_weights)


def transformer_encoder_forward(src_sbd, pos_sbd, layer_params_list, norm=None):
    """Mirrors TransformerEncoder.forward(src, mask=None, src_key_padding_mask=None, pos=pos).

    src_sbd / pos_sbd: (S, B, D) seq-first, like PyTorch nn.MultiheadAttention.
    All NUM_LAYERS layers run inside a single fused pallas_call (layer axis on the grid).
    """
    x = jnp.transpose(src_sbd, (1, 0, 2))     # -> (B, S, D)
    pos = jnp.transpose(pos_sbd, (1, 0, 2))
    stacked = _stack_layer_weights(layer_params_list)
    y = transformer_encoder_pallas(x, pos, stacked)
    # encoder-level norm is None (DETR normalize_before=False)
    return jnp.transpose(y, (1, 0, 2))        # back to (S, B, D)


def init_layer_params(key):
    ks = jax.random.split(key, 4)
    s = 0.05
    return dict(
        w_in=jax.random.normal(ks[0], (3 * D_MODEL, D_MODEL), jnp.float32) * s,
        b_in=jnp.zeros((3 * D_MODEL,), jnp.float32),
        w_out=jax.random.normal(ks[1], (D_MODEL, D_MODEL), jnp.float32) * s,
        b_out=jnp.zeros((D_MODEL,), jnp.float32),
        ln1_w=jnp.ones((D_MODEL,), jnp.float32),
        ln1_b=jnp.zeros((D_MODEL,), jnp.float32),
        w1=jax.random.normal(ks[2], (DIM_FF, D_MODEL), jnp.float32) * s,
        b1=jnp.zeros((DIM_FF,), jnp.float32),
        w2=jax.random.normal(ks[3], (D_MODEL, DIM_FF), jnp.float32) * s,
        b2=jnp.zeros((D_MODEL,), jnp.float32),
        ln2_w=jnp.ones((D_MODEL,), jnp.float32),
        ln2_b=jnp.zeros((D_MODEL,), jnp.float32),
    )


if __name__ == "__main__":
    key = jax.random.PRNGKey(0)
    k_src, k_pos, k_layers = jax.random.split(key, 3)

    S, B = 8, 2                                   # sequence length, batch
    src = jax.random.normal(k_src, (S, B, D_MODEL), jnp.float32)
    pos = jax.random.normal(k_pos, (S, B, D_MODEL), jnp.float32)

    layer_keys = jax.random.split(k_layers, NUM_LAYERS)
    params = [init_layer_params(lk) for lk in layer_keys]

    out = transformer_encoder_forward(src, pos, params)
    out = jax.block_until_ready(out)
    assert out.shape == (S, B, D_MODEL)
    assert bool(jnp.all(jnp.isfinite(out)))
    print("KERNEL_OK")
</pallas_src>

<mosaic_0001>
module attributes {stable_mosaic.version = 11 : i64} {
  func.func @encoder_layer_kernel(%arg0: i32, %arg1: i32, %arg2: memref<1x8x32xf32, #tpu.memory_space<vmem>>, %arg3: memref<1x8x32xf32, #tpu.memory_space<vmem>>, %arg4: memref<1x32x64xf32, #tpu.memory_space<vmem>>, %arg5: memref<1x1x64xf32, #tpu.memory_space<vmem>>, %arg6: memref<1x32x32xf32, #tpu.memory_space<vmem>>, %arg7: memref<1x1x32xf32, #tpu.memory_space<vmem>>, %arg8: memref<1x32x32xf32, #tpu.memory_space<vmem>>, %arg9: memref<1x1x32xf32, #tpu.memory_space<vmem>>, %arg10: memref<1x1x32xf32, #tpu.memory_space<vmem>>, %arg11: memref<1x1x32xf32, #tpu.memory_space<vmem>>, %arg12: memref<1x32x64xf32, #tpu.memory_space<vmem>>, %arg13: memref<1x1x64xf32, #tpu.memory_space<vmem>>, %arg14: memref<1x64x32xf32, #tpu.memory_space<vmem>>, %arg15: memref<1x1x32xf32, #tpu.memory_space<vmem>>, %arg16: memref<1x1x32xf32, #tpu.memory_space<vmem>>, %arg17: memref<1x1x32xf32, #tpu.memory_space<vmem>>, %arg18: memref<1x8x32xf32, #tpu.memory_space<vmem>>, %arg19: memref<8x32xf32, #tpu.memory_space<vmem>>) attributes {dimension_semantics = [#tpu.dimension_semantics<parallel>, #tpu.dimension_semantics<arbitrary>], iteration_bounds = array<i64: 2, 2>, scalar_prefetch = 0 : i64, scratch_operands = 1 : i64, tpu.core_type = #tpu.core_type<tc>, window_params = [{transform_indices = @transform_0, window_bounds = array<i64: 1, 8, 32>}, {transform_indices = @transform_1, window_bounds = array<i64: 1, 8, 32>}, {transform_indices = @transform_2, window_bounds = array<i64: 1, 32, 64>}, {transform_indices = @transform_3, window_bounds = array<i64: 1, 1, 64>}, {transform_indices = @transform_4, window_bounds = array<i64: 1, 32, 32>}, {transform_indices = @transform_5, window_bounds = array<i64: 1, 1, 32>}, {transform_indices = @transform_6, window_bounds = array<i64: 1, 32, 32>}, {transform_indices = @transform_7, window_bounds = array<i64: 1, 1, 32>}, {transform_indices = @transform_8, window_bounds = array<i64: 1, 1, 32>}, {transform_indices = @transform_9, window_bounds = array<i64: 1, 1, 32>}, {transform_indices = @transform_10, window_bounds = array<i64: 1, 32, 64>}, {transform_indices = @transform_11, window_bounds = array<i64: 1, 1, 64>}, {transform_indices = @transform_12, window_bounds = array<i64: 1, 64, 32>}, {transform_indices = @transform_13, window_bounds = array<i64: 1, 1, 32>}, {transform_indices = @transform_14, window_bounds = array<i64: 1, 1, 32>}, {transform_indices = @transform_15, window_bounds = array<i64: 1, 1, 32>}, {transform_indices = @transform_16, window_bounds = array<i64: 1, 8, 32>}]} {
    %c0_i32 = arith.constant 0 : i32
    %0 = arith.cmpi eq, %arg1, %c0_i32 : i32
    %1 = arith.extui %0 : i1 to i32
    %c0_i32_0 = arith.constant 0 : i32
    %2 = arith.cmpi ne, %1, %c0_i32_0 : i32
    scf.if %2 {
      %c0_81 = arith.constant 0 : index
      %c0_82 = arith.constant 0 : index
      %c0_83 = arith.constant 0 : index
      %165 = vector.load %arg2[%c0_81, %c0_82, %c0_83] : memref<1x8x32xf32, #tpu.memory_space<vmem>>, vector<1x8x32xf32>
      %166 = vector.shape_cast %165 : vector<1x8x32xf32> to vector<8x32xf32>
      %c0_84 = arith.constant 0 : index
      %c0_85 = arith.constant 0 : index
      %167 = vector.load %arg19[%c0_84, %c0_85] : memref<8x32xf32, #tpu.memory_space<vmem>>, vector<8x32xf32>
      tpu.vector_store %arg19[%c0_84, %c0_85], %166 {strides = array<i32>} : memref<8x32xf32, #tpu.memory_space<vmem>>, vector<8x32xf32>,
    } else {
    }
    %c0 = arith.constant 0 : index
    %c0_1 = arith.constant 0 : index
    %3 = vector.load %arg19[%c0, %c0_1] : memref<8x32xf32, #tpu.memory_space<vmem>>, vector<8x32xf32>
    %c0_2 = arith.constant 0 : index
    %c0_3 = arith.constant 0 : index
    %c0_4 = arith.constant 0 : index
    %4 = vector.load %arg3[%c0_2, %c0_3, %c0_4] : memref<1x8x32xf32, #tpu.memory_space<vmem>>, vector<1x8x32xf32>
    %5 = vector.shape_cast %4 : vector<1x8x32xf32> to vector<8x32xf32>
    %6 = arith.addf %3, %5 : vector<8x32xf32>
    %c0_5 = arith.constant 0 : index
    %c0_6 = arith.constant 0 : index
    %c0_7 = arith.constant 0 : index
    %7 = vector.load %arg4[%c0_5, %c0_6, %c0_7] : memref<1x32x64xf32, #tpu.memory_space<vmem>>, vector<1x32x64xf32>
    %8 = vector.shape_cast %7 : vector<1x32x64xf32> to vector<32x64xf32>
    %cst = arith.constant dense<0.000000e+00> : vector<8x64xf32>
    %9 = tpu.matmul %6, %8, %cst {dimension_numbers = #tpu.dot_dimension_numbers<[1], [0], [0], [1], [0, 0, 1, 1], [], []>} : vector<8x32xf32>, vector<32x64xf32>, vector<8x64xf32> -> vector<8x64xf32>
    %c0_8 = arith.constant 0 : index
    %c0_9 = arith.constant 0 : index
    %c0_10 = arith.constant 0 : index
    %10 = vector.load %arg5[%c0_8, %c0_9, %c0_10] : memref<1x1x64xf32, #tpu.memory_space<vmem>>, vector<1x1x64xf32>
    %11 = vector.shape_cast %10 : vector<1x1x64xf32> to vector<1x64xf32>
    %12 = vector.broadcast %11 : vector<1x64xf32> to vector<8x64xf32>
    %13 = arith.addf %9, %12 : vector<8x64xf32>
    %c0_11 = arith.constant 0 : index
    %c0_12 = arith.constant 0 : index
    %c0_13 = arith.constant 0 : index
    %14 = vector.load %arg6[%c0_11, %c0_12, %c0_13] : memref<1x32x32xf32, #tpu.memory_space<vmem>>, vector<1x32x32xf32>
    %15 = vector.shape_cast %14 : vector<1x32x32xf32> to vector<32x32xf32>
    %cst_14 = arith.constant dense<0.000000e+00> : vector<8x32xf32>
    %16 = tpu.matmul %3, %15, %cst_14 {dimension_numbers = #tpu.dot_dimension_numbers<[1], [0], [0], [1], [0, 0, 1, 1], [], []>} : vector<8x32xf32>, vector<32x32xf32>, vector<8x32xf32> -> vector<8x32xf32>
    %c0_15 = arith.constant 0 : index
    %c0_16 = arith.constant 0 : index
    %c0_17 = arith.constant 0 : index
    %17 = vector.load %arg7[%c0_15, %c0_16, %c0_17] : memref<1x1x32xf32, #tpu.memory_space<vmem>>, vector<1x1x32xf32>
    %18 = vector.shape_cast %17 : vector<1x1x32xf32> to vector<1x32xf32>
    %19 = vector.broadcast %18 : vector<1x32xf32> to vector<8x32xf32>
    %20 = arith.addf %16, %19 : vector<8x32xf32>
    %21 = vector.extract_strided_slice %13 {offsets = [0, 0], sizes = [8, 32], strides = [1, 1]} : vector<8x64xf32> to vector<8x32xf32>
    %22 = vector.extract_strided_slice %13 {offsets = [0, 32], sizes = [8, 32], strides = [1, 1]} : vector<8x64xf32> to vector<8x32xf32>
    %23 = vector.extract_strided_slice %21 {offsets = [0, 0], sizes = [8, 8], strides = [1, 1]} : vector<8x32xf32> to vector<8x8xf32>
    %24 = vector.extract_strided_slice %22 {offsets = [0, 0], sizes = [8, 8], strides = [1, 1]} : vector<8x32xf32> to vector<8x8xf32>
    %25 = vector.extract_strided_slice %20 {offsets = [0, 0], sizes = [8, 8], strides = [1, 1]} : vector<8x32xf32> to vector<8x8xf32>
    %cst_18 = arith.constant dense<0.000000e+00> : vector<8x8xf32>
    %26 = tpu.matmul %23, %24, %cst_18 {dimension_numbers = #tpu.dot_dimension_numbers<[1], [1], [0], [0], [0, 0, 1, 0], [], []>} : vector<8x8xf32>, vector<8x8xf32>, vector<8x8xf32> -> vector<8x8xf32>
    %cst_19 = arith.constant dense<0xFF800000> : vector<8xf32>
    %27 = vector.multi_reduction <maximumf>, %26, %cst_19 [1] : vector<8x8xf32> to vector<8xf32>
    %28 = vector.shape_cast %27 : vector<8xf32> to vector<8x1xf32>
    %29 = vector.broadcast %28 : vector<8x1xf32> to vector<8x8xf32>
    %30 = arith.subf %26, %29 : vector<8x8xf32>
    %31 = math.exp %30 : vector<8x8xf32>
    %cst_20 = arith.constant dense<0.000000e+00> : vector<8xf32>
    %32 = vector.multi_reduction <add>, %31, %cst_20 [1] : vector<8x8xf32> to vector<8xf32>
    %33 = vector.shape_cast %32 : vector<8xf32> to vector<8x1xf32>
    %34 = tpu.reciprocal %33 {approx = true} : vector<8x1xf32> -> vector<8x1xf32>
    %35 = vector.broadcast %34 : vector<8x1xf32> to vector<8x8xf32>
    %36 = arith.mulf %31, %35 : vector<8x8xf32>
    %cst_21 = arith.constant dense<0.000000e+00> : vector<8x8xf32>
    %37 = tpu.matmul %36, %25, %cst_21 {dimension_numbers = #tpu.dot_dimension_numbers<[1], [0], [0], [1], [0, 0, 1, 1], [], []>} : vector<8x8xf32>, vector<8x8xf32>, vector<8x8xf32> -> vector<8x8xf32>
    %38 = vector.extract_strided_slice %21 {offsets = [0, 8], sizes = [8, 8], strides = [1, 1]} : vector<8x32xf32> to vector<8x8xf32>
    %39 = vector.extract_strided_slice %22 {offsets = [0, 8], sizes = [8, 8], strides = [1, 1]} : vector<8x32xf32> to vector<8x8xf32>
    %40 = vector.extract_strided_slice %20 {offsets = [0, 8], sizes = [8, 8], strides = [1, 1]} : vector<8x32xf32> to vector<8x8xf32>
    %cst_22 = arith.constant dense<0.000000e+00> : vector<8x8xf32>
    %41 = tpu.matmul %38, %39, %cst_22 {dimension_numbers = #tpu.dot_dimension_numbers<[1], [1], [0], [0], [0, 0, 1, 0], [], []>} : vector<8x8xf32>, vector<8x8xf32>, vector<8x8xf32> -> vector<8x8xf32>
    %cst_23 = arith.constant dense<0xFF800000> : vector<8xf32>
    %42 = vector.multi_reduction <maximumf>, %41, %cst_23 [1] : vector<8x8xf32> to vector<8xf32>
    %43 = vector.shape_cast %42 : vector<8xf32> to vector<8x1xf32>
    %44 = vector.broadcast %43 : vector<8x1xf32> to vector<8x8xf32>
    %45 = arith.subf %41, %44 : vector<8x8xf32>
    %46 = math.exp %45 : vector<8x8xf32>
    %cst_24 = arith.constant dense<0.000000e+00> : vector<8xf32>
    %47 = vector.multi_reduction <add>, %46, %cst_24 [1] : vector<8x8xf32> to vector<8xf32>
    %48 = vector.shape_cast %47 : vector<8xf32> to vector<8x1xf32>
    %49 = tpu.reciprocal %48 {approx = true} : vector<8x1xf32> -> vector<8x1xf32>
    %50 = vector.broadcast %49 : vector<8x1xf32> to vector<8x8xf32>
    %51 = arith.mulf %46, %50 : vector<8x8xf32>
    %cst_25 = arith.constant dense<0.000000e+00> : vector<8x8xf32>
    %52 = tpu.matmul %51, %40, %cst_25 {dimension_numbers = #tpu.dot_dimension_numbers<[1], [0], [0], [1], [0, 0, 1, 1], [], []>} : vector<8x8xf32>, vector<8x8xf32>, vector<8x8xf32> -> vector<8x8xf32>
    %53 = vector.extract_strided_slice %21 {offsets = [0, 16], sizes = [8, 8], strides = [1, 1]} : vector<8x32xf32> to vector<8x8xf32>
    %54 = vector.extract_strided_slice %22 {offsets = [0, 16], sizes = [8, 8], strides = [1, 1]} : vector<8x32xf32> to vector<8x8xf32>
    %55 = vector.extract_strided_slice %20 {offsets = [0, 16], sizes = [8, 8], strides = [1, 1]} : vector<8x32xf32> to vector<8x8xf32>
    %cst_26 = arith.constant dense<0.000000e+00> : vector<8x8xf32>
    %56 = tpu.matmul %53, %54, %cst_26 {dimension_numbers = #tpu.dot_dimension_numbers<[1], [1], [0], [0], [0, 0, 1, 0], [], []>} : vector<8x8xf32>, vector<8x8xf32>, vector<8x8xf32> -> vector<8x8xf32>
    %cst_27 = arith.constant dense<0xFF800000> : vector<8xf32>
    %57 = vector.multi_reduction <maximumf>, %56, %cst_27 [1] : vector<8x8xf32> to vector<8xf32>
    %58 = vector.shape_cast %57 : vector<8xf32> to vector<8x1xf32>
    %59 = vector.broadcast %58 : vector<8x1xf32> to vector<8x8xf32>
    %60 = arith.subf %56, %59 : vector<8x8xf32>
    %61 = math.exp %60 : vector<8x8xf32>
    %cst_28 = arith.constant dense<0.000000e+00> : vector<8xf32>
    %62 = vector.multi_reduction <add>, %61, %cst_28 [1] : vector<8x8xf32> to vector<8xf32>
    %63 = vector.shape_cast %62 : vector<8xf32> to vector<8x1xf32>
    %64 = tpu.reciprocal %63 {approx = true} : vector<8x1xf32> -> vector<8x1xf32>
    %65 = vector.broadcast %64 : vector<8x1xf32> to vector<8x8xf32>
    %66 = arith.mulf %61, %65 : vector<8x8xf32>
    %cst_29 = arith.constant dense<0.000000e+00> : vector<8x8xf32>
    %67 = tpu.matmul %66, %55, %cst_29 {dimension_numbers = #tpu.dot_dimension_numbers<[1], [0], [0], [1], [0, 0, 1, 1], [], []>} : vector<8x8xf32>, vector<8x8xf32>, vector<8x8xf32> -> vector<8x8xf32>
    %68 = vector.extract_strided_slice %21 {offsets = [0, 24], sizes = [8, 8], strides = [1, 1]} : vector<8x32xf32> to vector<8x8xf32>
    %69 = vector.extract_strided_slice %22 {offsets = [0, 24], sizes = [8, 8], strides = [1, 1]} : vector<8x32xf32> to vector<8x8xf32>
    %70 = vector.extract_strided_slice %20 {offsets = [0, 24], sizes = [8, 8], strides = [1, 1]} : vector<8x32xf32> to vector<8x8xf32>
    %cst_30 = arith.constant dense<0.000000e+00> : vector<8x8xf32>
    %71 = tpu.matmul %68, %69, %cst_30 {dimension_numbers = #tpu.dot_dimension_numbers<[1], [1], [0], [0], [0, 0, 1, 0], [], []>} : vector<8x8xf32>, vector<8x8xf32>, vector<8x8xf32> -> vector<8x8xf32>
    %cst_31 = arith.constant dense<0xFF800000> : vector<8xf32>
    %72 = vector.multi_reduction <maximumf>, %71, %cst_31 [1] : vector<8x8xf32> to vector<8xf32>
    %73 = vector.shape_cast %72 : vector<8xf32> to vector<8x1xf32>
    %74 = vector.broadcast %73 : vector<8x1xf32> to vector<8x8xf32>
    %75 = arith.subf %71, %74 : vector<8x8xf32>
    %76 = math.exp %75 : vector<8x8xf32>
    %cst_32 = arith.constant dense<0.000000e+00> : vector<8xf32>
    %77 = vector.multi_reduction <add>, %76, %cst_32 [1] : vector<8x8xf32> to vector<8xf32>
    %78 = vector.shape_cast %77 : vector<8xf32> to vector<8x1xf32>
    %79 = tpu.reciprocal %78 {approx = true} : vector<8x1xf32> -> vector<8x1xf32>
    %80 = vector.broadcast %79 : vector<8x1xf32> to vector<8x8xf32>
    %81 = arith.mulf %76, %80 : vector<8x8xf32>
    %cst_33 = arith.constant dense<0.000000e+00> : vector<8x8xf32>
    %82 = tpu.matmul %81, %70, %cst_33 {dimension_numbers = #tpu.dot_dimension_numbers<[1], [0], [0], [1], [0, 0, 1, 1], [], []>} : vector<8x8xf32>, vector<8x8xf32>, vector<8x8xf32> -> vector<8x8xf32>
    %83 = tpu.concatenate %37, %52, %67, %82 in 1 : vector<8x8xf32>, vector<8x8xf32>, vector<8x8xf32>, vector<8x8xf32> -> vector<8x32xf32>
    %c0_34 = arith.constant 0 : index
    %c0_35 = arith.constant 0 : index
    %c0_36 = arith.constant 0 : index
    %84 = vector.load %arg8[%c0_34, %c0_35, %c0_36] : memref<1x32x32xf32, #tpu.memory_space<vmem>>, vector<1x32x32xf32>
    %85 = vector.shape_cast %84 : vector<1x32x32xf32> to vector<32x32xf32>
    %cst_37 = arith.constant dense<0.000000e+00> : vector<8x32xf32>
    %86 = tpu.matmul %83, %85, %cst_37 {dimension_numbers = #tpu.dot_dimension_numbers<[1], [0], [0], [1], [0, 0, 1, 1], [], []>} : vector<8x32xf32>, vector<32x32xf32>, vector<8x32xf32> -> vector<8x32xf32>
    %c0_38 = arith.constant 0 : index
    %c0_39 = arith.constant 0 : index
    %c0_40 = arith.constant 0 : index
    %87 = vector.load %arg9[%c0_38, %c0_39, %c0_40] : memref<1x1x32xf32, #tpu.memory_space<vmem>>, vector<1x1x32xf32>
    %88 = vector.shape_cast %87 : vector<1x1x32xf32> to vector<1x32xf32>
    %89 = vector.broadcast %88 : vector<1x32xf32> to vector<8x32xf32>
    %90 = arith.addf %86, %89 : vector<8x32xf32>
    %91 = arith.addf %3, %90 : vector<8x32xf32>
    %c0_41 = arith.constant 0 : index
    %c0_42 = arith.constant 0 : index
    %c0_43 = arith.constant 0 : index
    %92 = vector.load %arg10[%c0_41, %c0_42, %c0_43] : memref<1x1x32xf32, #tpu.memory_space<vmem>>, vector<1x1x32xf32>
    %93 = vector.shape_cast %92 : vector<1x1x32xf32> to vector<1x32xf32>
    %c0_44 = arith.constant 0 : index
    %c0_45 = arith.constant 0 : index
    %c0_46 = arith.constant 0 : index
    %94 = vector.load %arg11[%c0_44, %c0_45, %c0_46] : memref<1x1x32xf32, #tpu.memory_space<vmem>>, vector<1x1x32xf32>
    %95 = vector.shape_cast %94 : vector<1x1x32xf32> to vector<1x32xf32>
    %cst_47 = arith.constant dense<0.000000e+00> : vector<8xf32>
    %96 = vector.multi_reduction <add>, %91, %cst_47 [1] : vector<8x32xf32> to vector<8xf32>
    %97 = vector.shape_cast %96 : vector<8xf32> to vector<8x1xf32>
    %cst_48 = arith.constant 3.200000e+01 : f32
    %98 = vector.broadcast %cst_48 : f32 to vector<8x1xf32>
    %99 = arith.divf %97, %98 : vector<8x1xf32>
    %100 = vector.broadcast %99 : vector<8x1xf32> to vector<8x32xf32>
    %101 = arith.subf %91, %100 : vector<8x32xf32>
    %102 = arith.mulf %101, %101 : vector<8x32xf32>
    %cst_49 = arith.constant dense<0.000000e+00> : vector<8xf32>
    %103 = vector.multi_reduction <add>, %102, %cst_49 [1] : vector<8x32xf32> to vector<8xf32>
    %104 = vector.shape_cast %103 : vector<8xf32> to vector<8x1xf32>
    %cst_50 = arith.constant 3.200000e+01 : f32
    %105 = vector.broadcast %cst_50 : f32 to vector<8x1xf32>
    %106 = arith.divf %104, %105 : vector<8x1xf32>
    %107 = vector.broadcast %99 : vector<8x1xf32> to vector<8x32xf32>
    %108 = arith.subf %91, %107 : vector<8x32xf32>
    %cst_51 = arith.constant 9.99999974E-6 : f32
    %109 = vector.broadcast %cst_51 : f32 to vector<8x1xf32>
    %110 = arith.addf %106, %109 : vector<8x1xf32>
    %111 = math.rsqrt %110 : vector<8x1xf32>
    %112 = vector.broadcast %111 : vector<8x1xf32> to vector<8x32xf32>
    %113 = arith.mulf %108, %112 : vector<8x32xf32>
    %114 = vector.broadcast %93 : vector<1x32xf32> to vector<8x32xf32>
    %115 = arith.mulf %113, %114 : vector<8x32xf32>
    %116 = vector.broadcast %95 : vector<1x32xf32> to vector<8x32xf32>
    %117 = arith.addf %115, %116 : vector<8x32xf32>
    %c0_52 = arith.constant 0 : index
    %c0_53 = arith.constant 0 : index
    %c0_54 = arith.constant 0 : index
    %118 = vector.load %arg12[%c0_52, %c0_53, %c0_54] : memref<1x32x64xf32, #tpu.memory_space<vmem>>, vector<1x32x64xf32>
    %119 = vector.shape_cast %118 : vector<1x32x64xf32> to vector<32x64xf32>
    %cst_55 = arith.constant dense<0.000000e+00> : vector<8x64xf32>
    %120 = tpu.matmul %117, %119, %cst_55 {dimension_numbers = #tpu.dot_dimension_numbers<[1], [0], [0], [1], [0, 0, 1, 1], [], []>} : vector<8x32xf32>, vector<32x64xf32>, vector<8x64xf32> -> vector<8x64xf32>
    %c0_56 = arith.constant 0 : index
    %c0_57 = arith.constant 0 : index
    %c0_58 = arith.constant 0 : index
    %121 = vector.load %arg13[%c0_56, %c0_57, %c0_58] : memref<1x1x64xf32, #tpu.memory_space<vmem>>, vector<1x1x64xf32>
    %122 = vector.shape_cast %121 : vector<1x1x64xf32> to vector<1x64xf32>
    %123 = vector.broadcast %122 : vector<1x64xf32> to vector<8x64xf32>
    %124 = arith.addf %120, %123 : vector<8x64xf32>
    %cst_59 = arith.constant 0.000000e+00 : f32
    %125 = vector.broadcast %cst_59 : f32 to vector<8x64xf32>
    %126 = arith.maximumf %124, %125 : vector<8x64xf32>
    %c0_60 = arith.constant 0 : index
    %c0_61 = arith.constant 0 : index
    %c0_62 = arith.constant 0 : index
    %127 = vector.load %arg14[%c0_60, %c0_61, %c0_62] : memref<1x64x32xf32, #tpu.memory_space<vmem>>, vector<1x64x32xf32>
    %128 = vector.shape_cast %127 : vector<1x64x32xf32> to vector<64x32xf32>
    %cst_63 = arith.constant dense<0.000000e+00> : vector<8x32xf32>
    %129 = tpu.matmul %126, %128, %cst_63 {dimension_numbers = #tpu.dot_dimension_numbers<[1], [0], [0], [1], [0, 0, 1, 1], [], []>} : vector<8x64xf32>, vector<64x32xf32>, vector<8x32xf32> -> vector<8x32xf32>
    %c0_64 = arith.constant 0 : index
    %c0_65 = arith.constant 0 : index
    %c0_66 = arith.constant 0 : index
    %130 = vector.load %arg15[%c0_64, %c0_65, %c0_66] : memref<1x1x32xf32, #tpu.memory_space<vmem>>, vector<1x1x32xf32>
    %131 = vector.shape_cast %130 : vector<1x1x32xf32> to vector<1x32xf32>
    %132 = vector.broadcast %131 : vector<1x32xf32> to vector<8x32xf32>
    %133 = arith.addf %129, %132 : vector<8x32xf32>
    %134 = arith.addf %117, %133 : vector<8x32xf32>
    %c0_67 = arith.constant 0 : index
    %c0_68 = arith.constant 0 : index
    %c0_69 = arith.constant 0 : index
    %135 = vector.load %arg16[%c0_67, %c0_68, %c0_69] : memref<1x1x32xf32, #tpu.memory_space<vmem>>, vector<1x1x32xf32>
    %136 = vector.shape_cast %135 : vector<1x1x32xf32> to vector<1x32xf32>
    %c0_70 = arith.constant 0 : index
    %c0_71 = arith.constant 0 : index
    %c0_72 = arith.constant 0 : index
    %137 = vector.load %arg17[%c0_70, %c0_71, %c0_72] : memref<1x1x32xf32, #tpu.memory_space<vmem>>, vector<1x1x32xf32>
    %138 = vector.shape_cast %137 : vector<1x1x32xf32> to vector<1x32xf32>
    %cst_73 = arith.constant dense<0.000000e+00> : vector<8xf32>
    %139 = vector.multi_reduction <add>, %134, %cst_73 [1] : vector<8x32xf32> to vector<8xf32>
    %140 = vector.shape_cast %139 : vector<8xf32> to vector<8x1xf32>
    %cst_74 = arith.constant 3.200000e+01 : f32
    %141 = vector.broadcast %cst_74 : f32 to vector<8x1xf32>
    %142 = arith.divf %140, %141 : vector<8x1xf32>
    %143 = vector.broadcast %142 : vector<8x1xf32> to vector<8x32xf32>
    %144 = arith.subf %134, %143 : vector<8x32xf32>
    %145 = arith.mulf %144, %144 : vector<8x32xf32>
    %cst_75 = arith.constant dense<0.000000e+00> : vector<8xf32>
    %146 = vector.multi_reduction <add>, %145, %cst_75 [1] : vector<8x32xf32> to vector<8xf32>
    %147 = vector.shape_cast %146 : vector<8xf32> to vector<8x1xf32>
    %cst_76 = arith.constant 3.200000e+01 : f32
    %148 = vector.broadcast %cst_76 : f32 to vector<8x1xf32>
    %149 = arith.divf %147, %148 : vector<8x1xf32>
    %150 = vector.broadcast %142 : vector<8x1xf32> to vector<8x32xf32>
    %151 = arith.subf %134, %150 : vector<8x32xf32>
    %cst_77 = arith.constant 9.99999974E-6 : f32
    %152 = vector.broadcast %cst_77 : f32 to vector<8x1xf32>
    %153 = arith.addf %149, %152 : vector<8x1xf32>
    %154 = math.rsqrt %153 : vector<8x1xf32>
    %155 = vector.broadcast %154 : vector<8x1xf32> to vector<8x32xf32>
    %156 = arith.mulf %151, %155 : vector<8x32xf32>
    %157 = vector.broadcast %136 : vector<1x32xf32> to vector<8x32xf32>
    %158 = arith.mulf %156, %157 : vector<8x32xf32>
    %159 = vector.broadcast %138 : vector<1x32xf32> to vector<8x32xf32>
    %160 = arith.addf %158, %159 : vector<8x32xf32>
    %c0_78 = arith.constant 0 : index
    %c0_79 = arith.constant 0 : index
    %161 = vector.load %arg19[%c0_78, %c0_79] : memref<8x32xf32, #tpu.memory_space<vmem>>, vector<8x32xf32>
    tpu.vector_store %arg19[%c0_78, %c0_79], %160 {strides = array<i32>} : memref<8x32xf32, #tpu.memory_space<vmem>>, vector<8x32xf32>,
    %c1_i32 = arith.constant 1 : i32
    %162 = arith.cmpi eq, %arg1, %c1_i32 : i32
    %163 = arith.extui %162 : i1 to i32
    %c0_i32_80 = arith.constant 0 : i32
    %164 = arith.cmpi ne, %163, %c0_i32_80 : i32
    scf.if %164 {
      %c0_81 = arith.constant 0 : index
      %c0_82 = arith.constant 0 : index
      %c0_83 = arith.constant 0 : index
      %165 = vector.load %arg18[%c0_81, %c0_82, %c0_83] : memref<1x8x32xf32, #tpu.memory_space<vmem>>, vector<1x8x32xf32>
      %166 = vector.shape_cast %165 : vector<1x8x32xf32> to vector<8x32xf32>
      %167 = vector.shape_cast %160 : vector<8x32xf32> to vector<1x8x32xf32>
      tpu.vector_store %arg18[%c0_81, %c0_82, %c0_83], %167 {strides = array<i32>} : memref<1x8x32xf32, #tpu.memory_space<vmem>>, vector<1x8x32xf32>,
    } else {
    }
    return
  }
  func.func @transform_0(%arg0: i32, %arg1: i32) -> (i32, i32, i32) {
    %c0_i32 = arith.constant 0 : i32
    %c0_i32_0 = arith.constant 0 : i32
    %c0_i32_1 = arith.constant 0 : i32
    return %arg0, %c0_i32, %c0_i32_0 : i32, i32, i32
  }
  func.func @transform_1(%arg0: i32, %arg1: i32) -> (i32, i32, i32) {
    %c0_i32 = arith.constant 0 : i32
    %c0_i32_0 = arith.constant 0 : i32
    %c0_i32_1 = arith.constant 0 : i32
    return %arg0, %c0_i32, %c0_i32_0 : i32, i32, i32
  }
  func.func @transform_2(%arg0: i32, %arg1: i32) -> (i32, i32, i32) {
    %c0_i32 = arith.constant 0 : i32
    %c0_i32_0 = arith.constant 0 : i32
    %c0_i32_1 = arith.constant 0 : i32
    return %arg1, %c0_i32, %c0_i32_0 : i32, i32, i32
  }
  func.func @transform_3(%arg0: i32, %arg1: i32) -> (i32, i32, i32) {
    %c0_i32 = arith.constant 0 : i32
    %c0_i32_0 = arith.constant 0 : i32
    %c0_i32_1 = arith.constant 0 : i32
    return %arg1, %c0_i32, %c0_i32_0 : i32, i32, i32
  }
  func.func @transform_4(%arg0: i32, %arg1: i32) -> (i32, i32, i32) {
    %c0_i32 = arith.constant 0 : i32
    %c0_i32_0 = arith.constant 0 : i32
    %c0_i32_1 = arith.constant 0 : i32
    return %arg1, %c0_i32, %c0_i32_0 : i32, i32, i32
  }
  func.func @transform_5(%arg0: i32, %arg1: i32) -> (i32, i32, i32) {
    %c0_i32 = arith.constant 0 : i32
    %c0_i32_0 = arith.constant 0 : i32
    %c0_i32_1 = arith.constant 0 : i32
    return %arg1, %c0_i32, %c0_i32_0 : i32, i32, i32
  }
  func.func @transform_6(%arg0: i32, %arg1: i32) -> (i32, i32, i32) {
    %c0_i32 = arith.constant 0 : i32
    %c0_i32_0 = arith.constant 0 : i32
    %c0_i32_1 = arith.constant 0 : i32
    return %arg1, %c0_i32, %c0_i32_0 : i32, i32, i32
  }
  func.func @transform_7(%arg0: i32, %arg1: i32) -> (i32, i32, i32) {
    %c0_i32 = arith.constant 0 : i32
    %c0_i32_0 = arith.constant 0 : i32
    %c0_i32_1 = arith.constant 0 : i32
    return %arg1, %c0_i32, %c0_i32_0 : i32, i32, i32
  }
  func.func @transform_8(%arg0: i32, %arg1: i32) -> (i32, i32, i32) {
    %c0_i32 = arith.constant 0 : i32
    %c0_i32_0 = arith.constant 0 : i32
    %c0_i32_1 = arith.constant 0 : i32
    return %arg1, %c0_i32, %c0_i32_0 : i32, i32, i32
  }
  func.func @transform_9(%arg0: i32, %arg1: i32) -> (i32, i32, i32) {
    %c0_i32 = arith.constant 0 : i32
    %c0_i32_0 = arith.constant 0 : i32
    %c0_i32_1 = arith.constant 0 : i32
    return %arg1, %c0_i32, %c0_i32_0 : i32, i32, i32
  }
  func.func @transform_10(%arg0: i32, %arg1: i32) -> (i32, i32, i32) {
    %c0_i32 = arith.constant 0 : i32
    %c0_i32_0 = arith.constant 0 : i32
    %c0_i32_1 = arith.constant 0 : i32
    return %arg1, %c0_i32, %c0_i32_0 : i32, i32, i32
  }
  func.func @transform_11(%arg0: i32, %arg1: i32) -> (i32, i32, i32) {
    %c0_i32 = arith.constant 0 : i32
    %c0_i32_0 = arith.constant 0 : i32
    %c0_i32_1 = arith.constant 0 : i32
    return %arg1, %c0_i32, %c0_i32_0 : i32, i32, i32
  }
  func.func @transform_12(%arg0: i32, %arg1: i32) -> (i32, i32, i32) {
    %c0_i32 = arith.constant 0 : i32
    %c0_i32_0 = arith.constant 0 : i32
    %c0_i32_1 = arith.constant 0 : i32
    return %arg1, %c0_i32, %c0_i32_0 : i32, i32, i32
  }
  func.func @transform_13(%arg0: i32, %arg1: i32) -> (i32, i32, i32) {
    %c0_i32 = arith.constant 0 : i32
    %c0_i32_0 = arith.constant 0 : i32
    %c0_i32_1 = arith.constant 0 : i32
    return %arg1, %c0_i32, %c0_i32_0 : i32, i32, i32
  }
  func.func @transform_14(%arg0: i32, %arg1: i32) -> (i32, i32, i32) {
    %c0_i32 = arith.constant 0 : i32
    %c0_i32_0 = arith.constant 0 : i32
    %c0_i32_1 = arith.constant 0 : i32
    return %arg1, %c0_i32, %c0_i32_0 : i32, i32, i32
  }
  func.func @transform_15(%arg0: i32, %arg1: i32) -> (i32, i32, i32) {
    %c0_i32 = arith.constant 0 : i32
    %c0_i32_0 = arith.constant 0 : i32
    %c0_i32_1 = arith.constant 0 : i32
    return %arg1, %c0_i32, %c0_i32_0 : i32, i32, i32
  }
  func.func @transform_16(%arg0: i32, %arg1: i32) -> (i32, i32, i32) {
    %c0_i32 = arith.constant 0 : i32
    %c0_i32_0 = arith.constant 0 : i32
    %c0_i32_1 = arith.constant 0 : i32
    return %arg0, %c0_i32, %c0_i32_0 : i32, i32, i32
  }
}

</mosaic_0001>

<llo_original>
// kernel: tpu_custom_call.1
$region0: #{tpu_custom_call.1}
  #allocation0 [shape = 'u32[]', space=smem, size = 0x4, offset = 0x4, fixed_abs, tag = 'smem constant byte address 0x4 - core index']
  #allocation1 [shape = 'u32[72,128]{1,0:T(1,128)}', space=vmem, size = 0x9000, scoped, tag = 'internal scratch']
  #allocation2 [shape = 'f32[8,32]{1,0:T(8,128)}', space=vmem, size = 0x1000, scoped, tag = 'scratch operand']
  %s0 = inlined_call_operand.hbm [shape: f32[2,8,32], index: 0, kind: input, shape index: {}]
  %s1 = inlined_call_operand.hbm [shape: f32[2,8,32], index: 1, kind: input, shape index: {}]
  %s2 = inlined_call_operand.vmem [shape: f32[2,32,64], index: 2, kind: input, shape index: {}]
  %s3 = inlined_call_operand.vmem [shape: f32[2,1,64], index: 3, kind: input, shape index: {}]
  %s4 = inlined_call_operand.vmem [shape: f32[2,32,32], index: 4, kind: input, shape index: {}]
  %s5 = inlined_call_operand.hbm [shape: f32[2,1,32], index: 5, kind: input, shape index: {}]
  %s6 = inlined_call_operand.vmem [shape: f32[2,32,32], index: 6, kind: input, shape index: {}]
  %s7 = inlined_call_operand.vmem [shape: f32[2,1,32], index: 7, kind: input, shape index: {}]
  %s8 = inlined_call_operand.hbm [shape: f32[2,1,32], index: 8, kind: input, shape index: {}]
  %s9 = inlined_call_operand.vmem [shape: f32[2,1,32], index: 9, kind: input, shape index: {}]
  %s10 = inlined_call_operand.hbm [shape: f32[2,32,64], index: 10, kind: input, shape index: {}]
  %s11 = inlined_call_operand.vmem [shape: f32[2,1,64], index: 11, kind: input, shape index: {}]
  %s12 = inlined_call_operand.vmem [shape: f32[2,64,32], index: 12, kind: input, shape index: {}]
  %s13 = inlined_call_operand.vmem [shape: f32[2,1,32], index: 13, kind: input, shape index: {}]
  %s14 = inlined_call_operand.hbm [shape: f32[2,1,32], index: 14, kind: input, shape index: {}]
  %s15 = inlined_call_operand.vmem [shape: f32[2,1,32], index: 15, kind: input, shape index: {}]
  %s16 = inlined_call_operand.hbm [shape: f32[2,8,32], index: 16, kind: output, shape index: {}]
  %s17 = sld [smem:[#allocation0]]
  $region129: #{tpu_custom_call.1} parent=0
    _
  %s19 = ssub.s32 1, %s17
  %s20 = scalar_select 0, %s19, %s17
  $region1: #{tpu_custom_call.1} parent=0
    #allocation3 [shape = 'u8[8192]{0}', space=vmem, size = 0x2000, scoped, tag = 'input window, operand 0']
    #allocation4 [shape = 's32[2]{0}', space=sflag, size = 0x8, scoped, tag = 'scoped memory for tpu_custom_call.1']
    #allocation5 [shape = 's32[2]{0}', space=sflag, size = 0x8, scoped, tag = 'scoped memory for tpu_custom_call.1']
    #allocation6 [shape = 'u8[8192]{0}', space=vmem, size = 0x2000, scoped, tag = 'input window, operand 1']
    #allocation7 [shape = 's32[2]{0}', space=sflag, size = 0x8, scoped, tag = 'scoped memory for tpu_custom_call.1']
    #allocation8 [shape = 'u8[1024]{0}', space=vmem, size = 0x400, scoped, tag = 'input window, operand 5']
    #allocation9 [shape = 'u8[1024]{0}', space=vmem, size = 0x400, scoped, tag = 'input window, operand 8']
    #allocation10 [shape = 's32[2]{0}', space=sflag, size = 0x8, scoped, tag = 'scoped memory for tpu_custom_call.1']
    #allocation11 [shape = 'u8[32768]{0}', space=vmem, size = 0x8000, scoped, tag = 'input window, operand 10']
    #allocation12 [shape = 'u8[1024]{0}', space=vmem, size = 0x400, scoped, tag = 'input window, operand 14']
    #allocation13 [shape = 's32[2]{0}', space=sflag, size = 0x8, scoped, tag = 'scoped memory for tpu_custom_call.1']
    #allocation14 [shape = 'u8[8192]{0}', space=vmem, size = 0x2000, scoped, tag = 'output window, operand 0']
    %21 = vsyncpa [#allocation4], 0
    %s22 = scalar_lea.sflag [#allocation4], 1
    %23 = vsyncpa %s22, 0
    %24 = vsyncpa [#allocation7], 0
    %s25 = scalar_lea.sflag [#allocation7], 1
    %26 = vsyncpa %s25, 0
    %27 = vsyncpa [#allocation10], 0
    %s28 = scalar_lea.sflag [#allocation10], 1
    %29 = vsyncpa %s28, 0
    %30 = vsyncpa [#allocation13], 0
    %s31 = scalar_lea.sflag [#allocation13], 1
    %32 = vsyncpa %s31, 0
    %33 = vsyncpa [#allocation5], 0
    %s34 = scalar_lea.sflag [#allocation5], 1
    %35 = vsyncpa %s34, 0
    loop: start=0, step=1, limit=6
    $region2: #{tpu_custom_call.1} parent=1 // loop_pre_header
      _
    $region3: #{tpu_custom_call.1} parent=1 // loop_header
      %s37 = sphi 0, %s41
      %p38 = scmp.ge.s32.totalorder %s37, 6
      %s44 = sphi 0, %s56
      %s45 = sphi 0, %s52
      %s46 = sphi 0, %s44
      %s47 = sphi 0, %s45
      %s48 = sphi 0, %s46
      %s49 = sphi 0, %s47
      %s59 = sphi 0, %s61
      %s62 = sphi 0, %s59
      %s63 = sphi 0, %s62
      %s79 = sphi 0, %s63
      %s85 = sphi 0, %s87
      %s88 = sphi 0, %s85
      %s89 = sphi 0, %s88
      %s105 = sphi 0, %s89
      %s111 = sphi 0, %s113
      %s114 = sphi 0, %s111
      %s115 = sphi 0, %s114
      %s131 = sphi 0, %s115
      %s137 = sphi 0, %s139
      %s140 = sphi 0, %s137
      %s141 = sphi 0, %s140
      %s157 = sphi 0, %s141
      %s163 = sphi 0, %s165
      %s166 = sphi 0, %s163
      %s167 = sphi 0, %s166
      %s183 = sphi 0, %s167
      %s189 = sphi 0, %s191
      %s192 = sphi 0, %s189
      %s193 = sphi 0, %s192
      %s209 = sphi 0, %s193
      %s215 = sphi 0, %s217
      %s218 = sphi 0, %s215
      %s219 = sphi 0, %s218
      %s235 = sphi 0, %s219
      %s241 = sphi 0, %s243
      %s244 = sphi 0, %s241
      %s245 = sphi 0, %s244
      %s261 = sphi 0, %s245
      %s267 = sphi 0, %s269
      %s270 = sphi 0, %s267
      %s271 = sphi 0, %s270
      %s287 = sphi 0, %s271
      %s293 = sphi 0, %s295
      %s296 = sphi 0, %s293
      %s297 = sphi 0, %s296
      %s313 = sphi 0, %s297
      %s319 = sphi 0, %s321
      %s322 = sphi 0, %s319
      %s323 = sphi 0, %s322
      %s339 = sphi 0, %s323
      %s345 = sphi 0, %s347
      %s348 = sphi 0, %s345
      %s349 = sphi 0, %s348
      %s365 = sphi 0, %s349
      %s371 = sphi 0, %s373
      %s374 = sphi 0, %s371
      %s375 = sphi 0, %s374
      %s391 = sphi 0, %s375
      %s397 = sphi 0, %s399
      %s400 = sphi 0, %s397
      %s401 = sphi 0, %s400
      %s417 = sphi 0, %s401
      %s423 = sphi 0, %s425
      %s426 = sphi 0, %s423
      %s427 = sphi 0, %s426
      %s443 = sphi 0, %s427
      %s449 = sphi 0, %s451
      %s452 = sphi 0, %s449
      %s453 = sphi 0, %s452
      %s469 = sphi 0, %s453
      %s475 = sphi 0, %s477
      %s478 = sphi 0, %s475
      %s479 = sphi 0, %s478
      %s495 = sphi 0, %s479
    $region4: #{tpu_custom_call.1} parent=1 // loop_header_branch
      %40 = sbr.rel (%p38) target = $region8
    $region5: #{tpu_custom_call.1} parent=1 // loop_body
      %s42 = ssub.s32 %s37, 1
      %s43 = ssub.s32 %s37, 2
      %s50 = sadd.s32 1, %s45
      %p51 = scmp.ge.s32.totalorder %s50, 2
      %s52 = scalar_select %p51, 0, %s50
      %s53 = sadd.s32 1, %s44
      %s54 = scalar_select %p51, %s53, %s44
      %p55 = scmp.ge.s32.totalorder %s54, 2
      %s56 = scalar_select %p55, 0, %s54
      %s57 = ssub.s32 %s44, %s56
      %p58 = scmp.eq.s32.totalorder %s57, 0
      %s60 = sadd.s32 %s59, 1
      %s61 = scalar_select %p58, %s59, %s60
      %p64 = pneg %p58
      %p65 = scmp.eq.s32.totalorder %s37, 3
      %p66 = por %p64, %p65
      %p67 = scmp.ne.s32.totalorder %s59, %s62
      %p68 = scmp.eq.s32.totalorder %s37, 0
      %p69 = por %p67, %p68
      %p70 = scmp.ne.s32.totalorder %s59, %s62
      %p71 = scmp.eq.s32.totalorder %s42, 3
      %p72 = por %p70, %p71
      %p73 = scmp.ne.s32.totalorder %s62, %s63
      %p74 = scmp.eq.s32.totalorder %s42, 0
      %p75 = por %p73, %p74
      %p76 = scmp.ne.s32.totalorder %s62, %s63
      %p77 = scmp.eq.s32.totalorder %s43, 3
      %p78 = por %p76, %p77
      %p80 = scmp.ne.s32.totalorder %s63, %s79
      %p81 = scmp.eq.s32.totalorder %s43, 0
      %p82 = por %p80, %p81
      %s83 = ssub.s32 %s44, %s56
      %p84 = scmp.eq.s32.totalorder %s83, 0
      %s86 = sadd.s32 %s85, 1
      %s87 = scalar_select %p84, %s85, %s86
      %p90 = pneg %p84
      %p91 = scmp.eq.s32.totalorder %s37, 3
      %p92 = por %p90, %p91
      %p93 = scmp.ne.s32.totalorder %s85, %s88
      %p94 = scmp.eq.s32.totalorder %s37, 0
      %p95 = por %p93, %p94
      %p96 = scmp.ne.s32.totalorder %s85, %s88
      %p97 = scmp.eq.s32.totalorder %s42, 3
      %p98 = por %p96, %p97
      %p99 = scmp.ne.s32.totalorder %s88, %s89
      %p100 = scmp.eq.s32.totalorder %s42, 0
      %p101 = por %p99, %p100
      %p102 = scmp.ne.s32.totalorder %s88, %s89
      %p103 = scmp.eq.s32.totalorder %s43, 3
      %p104 = por %p102, %p103
      %p106 = scmp.ne.s32.totalorder %s89, %s105
      %p107 = scmp.eq.s32.totalorder %s43, 0
      %p108 = por %p106, %p107
      %s109 = ssub.s32 %s45, %s52
      %p110 = scmp.eq.s32.totalorder %s109, 0
      %s112 = sadd.s32 %s111, 1
      %s113 = scalar_select %p110, %s111, %s112
      %p116 = pneg %p110
      %p117 = scmp.eq.s32.totalorder %s37, 3
      %p118 = por %p116, %p117
      %p119 = scmp.ne.s32.totalorder %s111, %s114
      %p120 = scmp.eq.s32.totalorder %s37, 0
      %p121 = por %p119, %p120
      %p122 = scmp.ne.s32.totalorder %s111, %s114
      %p123 = scmp.eq.s32.totalorder %s42, 3
      %p124 = por %p122, %p123
      %p125 = scmp.ne.s32.totalorder %s114, %s115
      %p126 = scmp.eq.s32.totalorder %s42, 0
      %p127 = por %p125, %p126
      %p128 = scmp.ne.s32.totalorder %s114, %s115
      %p129 = scmp.eq.s32.totalorder %s43, 3
      %p130 = por %p128, %p129
      %p132 = scmp.ne.s32.totalorder %s115, %s131
      %p133 = scmp.eq.s32.totalorder %s43, 0
      %p134 = por %p132, %p133
      %s135 = ssub.s32 %s45, %s52
      %p136 = scmp.eq.s32.totalorder %s135, 0
      %s138 = sadd.s32 %s137, 1
      %s139 = scalar_select %p136, %s137, %s138
      %p142 = pneg %p136
      %p143 = scmp.eq.s32.totalorder %s37, 3
      %p144 = por %p142, %p143
      %p145 = scmp.ne.s32.totalorder %s137, %s140
      %p146 = scmp.eq.s32.totalorder %s37, 0
      %p147 = por %p145, %p146
      %p148 = scmp.ne.s32.totalorder %s137, %s140
      %p149 = scmp.eq.s32.totalorder %s42, 3
      %p150 = por %p148, %p149
      %p151 = scmp.ne.s32.totalorder %s140, %s141
      %p152 = scmp.eq.s32.totalorder %s42, 0
      %p153 = por %p151, %p152
      %p154 = scmp.ne.s32.totalorder %s140, %s141
      %p155 = scmp.eq.s32.totalorder %s43, 3
      %p156 = por %p154, %p155
      %p158 = scmp.ne.s32.totalorder %s141, %s157
      %p159 = scmp.eq.s32.totalorder %s43, 0
      %p160 = por %p158, %p159
      %s161 = ssub.s32 %s45, %s52
      %p162 = scmp.eq.s32.totalorder %s161, 0
      %s164 = sadd.s32 %s163, 1
      %s165 = scalar_select %p162, %s163, %s164
      %p168 = pneg %p162
      %p169 = scmp.eq.s32.totalorder %s37, 3
      %p170 = por %p168, %p169
      %p171 = scmp.ne.s32.totalorder %s163, %s166
      %p172 = scmp.eq.s32.totalorder %s37, 0
      %p173 = por %p171, %p172
      %p174 = scmp.ne.s32.totalorder %s163, %s166
      %p175 = scmp.eq.s32.totalorder %s42, 3
      %p176 = por %p174, %p175
      %p177 = scmp.ne.s32.totalorder %s166, %s167
      %p178 = scmp.eq.s32.totalorder %s42, 0
      %p179 = por %p177, %p178
      %p180 = scmp.ne.s32.totalorder %s166, %s167
      %p181 = scmp.eq.s32.totalorder %s43, 3
      %p182 = por %p180, %p181
      %p184 = scmp.ne.s32.totalorder %s167, %s183
      %p185 = scmp.eq.s32.totalorder %s43, 0
      %p186 = por %p184, %p185
      %s187 = ssub.s32 %s45, %s52
      %p188 = scmp.eq.s32.totalorder %s187, 0
      %s190 = sadd.s32 %s189, 1
      %s191 = scalar_select %p188, %s189, %s190
      %p194 = pneg %p188
      %p195 = scmp.eq.s32.totalorder %s37, 3
      %p196 = por %p194, %p195
      %p197 = scmp.ne.s32.totalorder %s189, %s192
      %p198 = scmp.eq.s32.totalorder %s37, 0
      %p199 = por %p197, %p198
      %p200 = scmp.ne.s32.totalorder %s189, %s192
      %p201 = scmp.eq.s32.totalorder %s42, 3
      %p202 = por %p200, %p201
      %p203 = scmp.ne.s32.totalorder %s192, %s193
      %p204 = scmp.eq.s32.totalorder %s42, 0
      %p205 = por %p203, %p204
      %p206 = scmp.ne.s32.totalorder %s192, %s193
      %p207 = scmp.eq.s32.totalorder %s43, 3
      %p208 = por %p206, %p207
      %p210 = scmp.ne.s32.totalorder %s193, %s209
      %p211 = scmp.eq.s32.totalorder %s43, 0
      %p212 = por %p210, %p211
      %s213 = ssub.s32 %s45, %s52
      %p214 = scmp.eq.s32.totalorder %s213, 0
      %s216 = sadd.s32 %s215, 1
      %s217 = scalar_select %p214, %s215, %s216
      %p220 = pneg %p214
      %p221 = scmp.eq.s32.totalorder %s37, 3
      %p222 = por %p220, %p221
      %p223 = scmp.ne.s32.totalorder %s215, %s218
      %p224 = scmp.eq.s32.totalorder %s37, 0
      %p225 = por %p223, %p224
      %p226 = scmp.ne.s32.totalorder %s215, %s218
      %p227 = scmp.eq.s32.totalorder %s42, 3
      %p228 = por %p226, %p227
      %p229 = scmp.ne.s32.totalorder %s218, %s219
      %p230 = scmp.eq.s32.totalorder %s42, 0
      %p231 = por %p229, %p230
      %p232 = scmp.ne.s32.totalorder %s218, %s219
      %p233 = scmp.eq.s32.totalorder %s43, 3
      %p234 = por %p232, %p233
      %p236 = scmp.ne.s32.totalorder %s219, %s235
      %p237 = scmp.eq.s32.totalorder %s43, 0
      %p238 = por %p236, %p237
      %s239 = ssub.s32 %s45, %s52
      %p240 = scmp.eq.s32.totalorder %s239, 0
      %s242 = sadd.s32 %s241, 1
      %s243 = scalar_select %p240, %s241, %s242
      %p246 = pneg %p240
      %p247 = scmp.eq.s32.totalorder %s37, 3
      %p248 = por %p246, %p247
      %p249 = scmp.ne.s32.totalorder %s241, %s244
      %p250 = scmp.eq.s32.totalorder %s37, 0
      %p251 = por %p249, %p250
      %p252 = scmp.ne.s32.totalorder %s241, %s244
      %p253 = scmp.eq.s32.totalorder %s42, 3
      %p254 = por %p252, %p253
      %p255 = scmp.ne.s32.totalorder %s244, %s245
      %p256 = scmp.eq.s32.totalorder %s42, 0
      %p257 = por %p255, %p256
      %p258 = scmp.ne.s32.totalorder %s244, %s245
      %p259 = scmp.eq.s32.totalorder %s43, 3
      %p260 = por %p258, %p259
      %p262 = scmp.ne.s32.totalorder %s245, %s261
      %p263 = scmp.eq.s32.totalorder %s43, 0
      %p264 = por %p262, %p263
      %s265 = ssub.s32 %s45, %s52
      %p266 = scmp.eq.s32.totalorder %s265, 0
      %s268 = sadd.s32 %s267, 1
      %s269 = scalar_select %p266, %s267, %s268
      %p272 = pneg %p266
      %p273 = scmp.eq.s32.totalorder %s37, 3
      %p274 = por %p272, %p273
      %p275 = scmp.ne.s32.totalorder %s267, %s270
      %p276 = scmp.eq.s32.totalorder %s37, 0
      %p277 = por %p275, %p276
      %p278 = scmp.ne.s32.totalorder %s267, %s270
      %p279 = scmp.eq.s32.totalorder %s42, 3
      %p280 = por %p278, %p279
      %p281 = scmp.ne.s32.totalorder %s270, %s271
      %p282 = scmp.eq.s32.totalorder %s42, 0
      %p283 = por %p281, %p282
      %p284 = scmp.ne.s32.totalorder %s270, %s271
      %p285 = scmp.eq.s32.totalorder %s43, 3
      %p286 = por %p284, %p285
      %p288 = scmp.ne.s32.totalorder %s271, %s287
      %p289 = scmp.eq.s32.totalorder %s43, 0
      %p290 = por %p288, %p289
      %s291 = ssub.s32 %s45, %s52
      %p292 = scmp.eq.s32.totalorder %s291, 0
      %s294 = sadd.s32 %s293, 1
      %s295 = scalar_select %p292, %s293, %s294
      %p298 = pneg %p292
      %p299 = scmp.eq.s32.totalorder %s37, 3
      %p300 = por %p298, %p299
      %p301 = scmp.ne.s32.totalorder %s293, %s296
      %p302 = scmp.eq.s32.totalorder %s37, 0
      %p303 = por %p301, %p302
      %p304 = scmp.ne.s32.totalorder %s293, %s296
      %p305 = scmp.eq.s32.totalorder %s42, 3
      %p306 = por %p304, %p305
      %p307 = scmp.ne.s32.totalorder %s296, %s297
      %p308 = scmp.eq.s32.totalorder %s42, 0
      %p309 = por %p307, %p308
      %p310 = scmp.ne.s32.totalorder %s296, %s297
      %p311 = scmp.eq.s32.totalorder %s43, 3
      %p312 = por %p310, %p311
      %p314 = scmp.ne.s32.totalorder %s297, %s313
      %p315 = scmp.eq.s32.totalorder %s43, 0
      %p316 = por %p314, %p315
      %s317 = ssub.s32 %s45, %s52
      %p318 = scmp.eq.s32.totalorder %s317, 0
      %s320 = sadd.s32 %s319, 1
      %s321 = scalar_select %p318, %s319, %s320
      %p324 = pneg %p318
      %p325 = scmp.eq.s32.totalorder %s37, 3
      %p326 = por %p324, %p325
      %p327 = scmp.ne.s32.totalorder %s319, %s322
      %p328 = scmp.eq.s32.totalorder %s37, 0
      %p329 = por %p327, %p328
      %p330 = scmp.ne.s32.totalorder %s319, %s322
      %p331 = scmp.eq.s32.totalorder %s42, 3
      %p332 = por %p330, %p331
      %p333 = scmp.ne.s32.totalorder %s322, %s323
      %p334 = scmp.eq.s32.totalorder %s42, 0
      %p335 = por %p333, %p334
      %p336 = scmp.ne.s32.totalorder %s322, %s323
      %p337 = scmp.eq.s32.totalorder %s43, 3
      %p338 = por %p336, %p337
      %p340 = scmp.ne.s32.totalorder %s323, %s339
      %p341 = scmp.eq.s32.totalorder %s43, 0
      %p342 = por %p340, %p341
      %s343 = ssub.s32 %s45, %s52
      %p344 = scmp.eq.s32.totalorder %s343, 0
      %s346 = sadd.s32 %s345, 1
      %s347 = scalar_select %p344, %s345, %s346
      %p350 = pneg %p344
      %p351 = scmp.eq.s32.totalorder %s37, 3
      %p352 = por %p350, %p351
      %p353 = scmp.ne.s32.totalorder %s345, %s348
      %p354 = scmp.eq.s32.totalorder %s37, 0
      %p355 = por %p353, %p354
      %p356 = scmp.ne.s32.totalorder %s345, %s348
      %p357 = scmp.eq.s32.totalorder %s42, 3
      %p358 = por %p356, %p357
      %p359 = scmp.ne.s32.totalorder %s348, %s349
      %p360 = scmp.eq.s32.totalorder %s42, 0
      %p361 = por %p359, %p360
      %p362 = scmp.ne.s32.totalorder %s348, %s349
      %p363 = scmp.eq.s32.totalorder %s43, 3
      %p364 = por %p362, %p363
      %p366 = scmp.ne.s32.totalorder %s349, %s365
      %p367 = scmp.eq.s32.totalorder %s43, 0
      %p368 = por %p366, %p367
      %s369 = ssub.s32 %s45, %s52
      %p370 = scmp.eq.s32.totalorder %s369, 0
      %s372 = sadd.s32 %s371, 1
      %s373 = scalar_select %p370, %s371, %s372
      %p376 = pneg %p370
      %p377 = scmp.eq.s32.totalorder %s37, 3
      %p378 = por %p376, %p377
      %p379 = scmp.ne.s32.totalorder %s371, %s374
      %p380 = scmp.eq.s32.totalorder %s37, 0
      %p381 = por %p379, %p380
      %p382 = scmp.ne.s32.totalorder %s371, %s374
      %p383 = scmp.eq.s32.totalorder %s42, 3
      %p384 = por %p382, %p383
      %p385 = scmp.ne.s32.totalorder %s374, %s375
      %p386 = scmp.eq.s32.totalorder %s42, 0
      %p387 = por %p385, %p386
      %p388 = scmp.ne.s32.totalorder %s374, %s375
      %p389 = scmp.eq.s32.totalorder %s43, 3
      %p390 = por %p388, %p389
      %p392 = scmp.ne.s32.totalorder %s375, %s391
      %p393 = scmp.eq.s32.totalorder %s43, 0
      %p394 = por %p392, %p393
      %s395 = ssub.s32 %s45, %s52
      %p396 = scmp.eq.s32.totalorder %s395, 0
      %s398 = sadd.s32 %s397, 1
      %s399 = scalar_select %p396, %s397, %s398
      %p402 = pneg %p396
      %p403 = scmp.eq.s32.totalorder %s37, 3
      %p404 = por %p402, %p403
      %p405 = scmp.ne.s32.totalorder %s397, %s400
      %p406 = scmp.eq.s32.totalorder %s37, 0
      %p407 = por %p405, %p406
      %p408 = scmp.ne.s32.totalorder %s397, %s400
      %p409 = scmp.eq.s32.totalorder %s42, 3
      %p410 = por %p408, %p409
      %p411 = scmp.ne.s32.totalorder %s400, %s401
      %p412 = scmp.eq.s32.totalorder %s42, 0
      %p413 = por %p411, %p412
      %p414 = scmp.ne.s32.totalorder %s400, %s401
      %p415 = scmp.eq.s32.totalorder %s43, 3
      %p416 = por %p414, %p415
      %p418 = scmp.ne.s32.totalorder %s401, %s417
      %p419 = scmp.eq.s32.totalorder %s43, 0
      %p420 = por %p418, %p419
      %s421 = ssub.s32 %s45, %s52
      %p422 = scmp.eq.s32.totalorder %s421, 0
      %s424 = sadd.s32 %s423, 1
      %s425 = scalar_select %p422, %s423, %s424
      %p428 = pneg %p422
      %p429 = scmp.eq.s32.totalorder %s37, 3
      %p430 = por %p428, %p429
      %p431 = scmp.ne.s32.totalorder %s423, %s426
      %p432 = scmp.eq.s32.totalorder %s37, 0
      %p433 = por %p431, %p432
      %p434 = scmp.ne.s32.totalorder %s423, %s426
      %p435 = scmp.eq.s32.totalorder %s42, 3
      %p436 = por %p434, %p435
      %p437 = scmp.ne.s32.totalorder %s426, %s427
      %p438 = scmp.eq.s32.totalorder %s42, 0
      %p439 = por %p437, %p438
      %p440 = scmp.ne.s32.totalorder %s426, %s427
      %p441 = scmp.eq.s32.totalorder %s43, 3
      %p442 = por %p440, %p441
      %p444 = scmp.ne.s32.totalorder %s427, %s443
      %p445 = scmp.eq.s32.totalorder %s43, 0
      %p446 = por %p444, %p445
      %s447 = ssub.s32 %s45, %s52
      %p448 = scmp.eq.s32.totalorder %s447, 0
      %s450 = sadd.s32 %s449, 1
      %s451 = scalar_select %p448, %s449, %s450
      %p454 = pneg %p448
      %p455 = scmp.eq.s32.totalorder %s37, 3
      %p456 = por %p454, %p455
      %p457 = scmp.ne.s32.totalorder %s449, %s452
      %p458 = scmp.eq.s32.totalorder %s37, 0
      %p459 = por %p457, %p458
      %p460 = scmp.ne.s32.totalorder %s449, %s452
      %p461 = scmp.eq.s32.totalorder %s42, 3
      %p462 = por %p460, %p461
      %p463 = scmp.ne.s32.totalorder %s452, %s453
      %p464 = scmp.eq.s32.totalorder %s42, 0
      %p465 = por %p463, %p464
      %p466 = scmp.ne.s32.totalorder %s452, %s453
      %p467 = scmp.eq.s32.totalorder %s43, 3
      %p468 = por %p466, %p467
      %p470 = scmp.ne.s32.totalorder %s453, %s469
      %p471 = scmp.eq.s32.totalorder %s43, 0
      %p472 = por %p470, %p471
      %s473 = ssub.s32 %s44, %s56
      %p474 = scmp.eq.s32.totalorder %s473, 0
      %s476 = sadd.s32 %s475, 1
      %s477 = scalar_select %p474, %s475, %s476
      %p480 = pneg %p474
      %p481 = scmp.eq.s32.totalorder %s37, 3
      %p482 = por %p480, %p481
      %p483 = scmp.ne.s32.totalorder %s475, %s478
      %p484 = scmp.eq.s32.totalorder %s37, 0
      %p485 = por %p483, %p484
      %p486 = scmp.ne.s32.totalorder %s475, %s478
      %p487 = scmp.eq.s32.totalorder %s42, 3
      %p488 = por %p486, %p487
      %p489 = scmp.ne.s32.totalorder %s478, %s479
      %p490 = scmp.eq.s32.totalorder %s42, 0
      %p491 = por %p489, %p490
      %p492 = scmp.ne.s32.totalorder %s478, %s479
      %p493 = scmp.eq.s32.totalorder %s43, 3
      %p494 = por %p492, %p493
      %p496 = scmp.ne.s32.totalorder %s479, %s495
      %p497 = scmp.eq.s32.totalorder %s43, 0
      %p498 = por %p496, %p497
      %p499 = scmp.le.s32.totalorder 1, %s37
      %p500 = scmp.lt.s32.totalorder %s37, 5
      %p501 = pnand %p499, %p500
      %p502 = pneg %p501
      // Predicated region
      $region9: #{tpu_custom_call.1} parent=5 // pred_check
        _
      $region10: #{tpu_custom_call.1} parent=5 // pred_check_branch
        %504 = sbr.rel (%p501) target = $region12
      $region11: #{tpu_custom_call.1} parent=5 // pred_region
        %s505 = ssub.s32 %s37, 1
      $region12: #{tpu_custom_call.1} parent=5 // pred_fallthru
        _
      %p506 = scmp.lt.s32.totalorder %s37, 4
      // Predicated region
      $region13: #{tpu_custom_call.1} parent=5 // pred_check
        %p507 = pneg %p506
      $region14: #{tpu_custom_call.1} parent=5 // pred_check_branch
        %509 = sbr.rel (%p507) target = $region16
      $region15: #{tpu_custom_call.1} parent=5 // pred_region
        // Predicated region
        $region17: #{tpu_custom_call.1} parent=15 // pred_check
          %p510 = pneg %p69
        $region18: #{tpu_custom_call.1} parent=15 // pred_check_branch
          %512 = sbr.rel (%p510) target = $region20
        $region19: #{tpu_custom_call.1} parent=15 // pred_region
          %s513 = sand.u32 %s59, 1
          %s514 = scalar_lea.sflag [#allocation4], %s513
          %s515 = sand.u32 %s59, 1
          %s516 = smul.addr %s515, 8
          %s517 = scalar_lea.vmem [#allocation3], %s516
          %519 = vsyncadd %s514, 0
          %s520 = smul.addr %s44, 8
          %s521 = scalar_lea.hbm %s0, %s520
          %s523 = sshll.u32 %s521, 4
          %s524 = int_to_ptr.hbm [resolvable:$true] %s523
          %s525 = sshll.u32 %s517, 4
          %s526 = int_to_ptr.vmem [resolvable:$true] %s525
          %528 = dma.hbm_to_vmem [thread:$0]  %s524, 128, %s526, %s514
        $region20: #{tpu_custom_call.1} parent=15 // pred_fallthru
          _
        // Predicated region
        $region21: #{tpu_custom_call.1} parent=15 // pred_check
          %p529 = pneg %p95
        $region22: #{tpu_custom_call.1} parent=15 // pred_check_branch
          %531 = sbr.rel (%p529) target = $region24
        $region23: #{tpu_custom_call.1} parent=15 // pred_region
          %s532 = sand.u32 %s37, 1
          %s533 = scalar_lea.sflag [#allocation7], %s532
          %s534 = sand.u32 %s85, 1
          %s535 = smul.addr %s534, 8
          %s536 = scalar_lea.vmem [#allocation6], %s535
          %538 = vsyncadd %s533, 0
          %s539 = smul.addr %s44, 8
          %s540 = scalar_lea.hbm %s1, %s539
          %s542 = sshll.u32 %s540, 4
          %s543 = int_to_ptr.hbm [resolvable:$true] %s542
          %s544 = sshll.u32 %s536, 4
          %s545 = int_to_ptr.vmem [resolvable:$true] %s544
          %547 = dma.hbm_to_vmem [thread:$0]  %s543, 128, %s545, %s533
        $region24: #{tpu_custom_call.1} parent=15 // pred_fallthru
          _
        // Predicated region
        $region25: #{tpu_custom_call.1} parent=15 // pred_check
          %p548 = pneg %p121
        $region26: #{tpu_custom_call.1} parent=15 // pred_check_branch
          %550 = sbr.rel (%p548) target = $region28
        $region27: #{tpu_custom_call.1} parent=15 // pred_region
          %p551 = scmp.lt.s32.totalorder %s45, 1
          %s552 = scalar_select %p551, %s45, 1
          %s553 = smul.addr %s552, 4
          %s554 = smul.addr %s553, 8
          %s555 = scalar_lea.vmem %s2, %s554
        $region28: #{tpu_custom_call.1} parent=15 // pred_fallthru
          _
        // Predicated region
        $region29: #{tpu_custom_call.1} parent=15 // pred_check
          %p556 = pneg %p147
        $region30: #{tpu_custom_call.1} parent=15 // pred_check_branch
          %558 = sbr.rel (%p556) target = $region32
        $region31: #{tpu_custom_call.1} parent=15 // pred_region
          %p559 = scmp.lt.s32.totalorder %s45, 1
          %s560 = scalar_select %p559, %s45, 1
          %s561 = scalar_lea.vmem %s3, %s560
        $region32: #{tpu_custom_call.1} parent=15 // pred_fallthru
          _
        // Predicated region
        $region33: #{tpu_custom_call.1} parent=15 // pred_check
          %p562 = pneg %p173
        $region34: #{tpu_custom_call.1} parent=15 // pred_check_branch
          %564 = sbr.rel (%p562) target = $region36
        $region35: #{tpu_custom_call.1} parent=15 // pred_region
          %p565 = scmp.lt.s32.totalorder %s45, 1
          %s566 = scalar_select %p565, %s45, 1
          %s567 = smul.addr %s566, 4
          %s568 = smul.addr %s567, 8
          %s569 = scalar_lea.vmem %s4, %s568
        $region36: #{tpu_custom_call.1} parent=15 // pred_fallthru
          _
        // Predicated region
        $region37: #{tpu_custom_call.1} parent=15 // pred_check
          %p570 = pneg %p199
        $region38: #{tpu_custom_call.1} parent=15 // pred_check_branch
          %572 = sbr.rel (%p570) target = $region40
        $region39: #{tpu_custom_call.1} parent=15 // pred_region
          %s573 = sand.u32 %s37, 1
          %s574 = scalar_lea.sflag [#allocation7], %s573
          %s575 = sand.u32 %s189, 1
          %s576 = scalar_lea.vmem [#allocation8], %s575
          %578 = vsyncadd %s574, 0
          %s579 = scalar_lea.hbm %s5, %s45
          %s581 = sshll.u32 %s579, 4
          %s582 = int_to_ptr.hbm [resolvable:$true] %s581
          %s583 = sshll.u32 %s576, 4
          %s584 = int_to_ptr.vmem [resolvable:$true] %s583
          %586 = dma.hbm_to_vmem [thread:$0]  %s582, 16, %s584, %s574
        $region40: #{tpu_custom_call.1} parent=15 // pred_fallthru
          _
        // Predicated region
        $region41: #{tpu_custom_call.1} parent=15 // pred_check
          %p587 = pneg %p225
        $region42: #{tpu_custom_call.1} parent=15 // pred_check_branch
          %589 = sbr.rel (%p587) target = $region44
        $region43: #{tpu_custom_call.1} parent=15 // pred_region
          %p590 = scmp.lt.s32.totalorder %s45, 1
          %s591 = scalar_select %p590, %s45, 1
          %s592 = smul.addr %s591, 4
          %s593 = smul.addr %s592, 8
          %s594 = scalar_lea.vmem %s6, %s593
        $region44: #{tpu_custom_call.1} parent=15 // pred_fallthru
          _
        // Predicated region
        $region45: #{tpu_custom_call.1} parent=15 // pred_check
          %p595 = pneg %p251
        $region46: #{tpu_custom_call.1} parent=15 // pred_check_branch
          %597 = sbr.rel (%p595) target = $region48
        $region47: #{tpu_custom_call.1} parent=15 // pred_region
          %p598 = scmp.lt.s32.totalorder %s45, 1
          %s599 = scalar_select %p598, %s45, 1
          %s600 = scalar_lea.vmem %s7, %s599
        $region48: #{tpu_custom_call.1} parent=15 // pred_fallthru
          _
        // Predicated region
        $region49: #{tpu_custom_call.1} parent=15 // pred_check
          %p601 = pneg %p277
        $region50: #{tpu_custom_call.1} parent=15 // pred_check_branch
          %603 = sbr.rel (%p601) target = $region52
        $region51: #{tpu_custom_call.1} parent=15 // pred_region
          %s604 = sand.u32 %s37, 1
          %s605 = scalar_lea.sflag [#allocation10], %s604
          %s606 = sand.u32 %s267, 1
          %s607 = scalar_lea.vmem [#allocation9], %s606
          %609 = vsyncadd %s605, 0
          %s610 = scalar_lea.hbm %s8, %s45
          %s612 = sshll.u32 %s610, 4
          %s613 = int_to_ptr.hbm [resolvable:$true] %s612
          %s614 = sshll.u32 %s607, 4
          %s615 = int_to_ptr.vmem [resolvable:$true] %s614
          %617 = dma.hbm_to_vmem [thread:$0]  %s613, 16, %s615, %s605
        $region52: #{tpu_custom_call.1} parent=15 // pred_fallthru
          _
        // Predicated region
        $region53: #{tpu_custom_call.1} parent=15 // pred_check
          %p618 = pneg %p303
        $region54: #{tpu_custom_call.1} parent=15 // pred_check_branch
          %620 = sbr.rel (%p618) target = $region56
        $region55: #{tpu_custom_call.1} parent=15 // pred_region
          %p621 = scmp.lt.s32.totalorder %s45, 1
          %s622 = scalar_select %p621, %s45, 1
          %s623 = scalar_lea.vmem %s9, %s622
        $region56: #{tpu_custom_call.1} parent=15 // pred_fallthru
          _
        // Predicated region
        $region57: #{tpu_custom_call.1} parent=15 // pred_check
          %p624 = pneg %p329
        $region58: #{tpu_custom_call.1} parent=15 // pred_check_branch
          %626 = sbr.rel (%p624) target = $region60
        $region59: #{tpu_custom_call.1} parent=15 // pred_region
          %s627 = sand.u32 %s37, 1
          %s628 = scalar_lea.sflag [#allocation10], %s627
          %s629 = sand.u32 %s319, 1
          %s630 = smul.addr %s629, 32
          %s631 = scalar_lea.vmem [#allocation11], %s630
          %633 = vsyncadd %s628, 0
          %s634 = smul.addr %s45, 4
          %s635 = smul.addr %s634, 8
          %s636 = scalar_lea.hbm %s10, %s635
          %s637 = sshll.u32 %s636, 4
          %s638 = int_to_ptr.hbm [resolvable:$true] %s637
          %s639 = sshll.u32 %s631, 4
          %s640 = int_to_ptr.vmem [resolvable:$true] %s639
          %645 = dma.hbm_to_vmem [thread:$0]  %s638, 512, %s640, %s628, 128, 128, 8
        $region60: #{tpu_custom_call.1} parent=15 // pred_fallthru
          _
        // Predicated region
        $region61: #{tpu_custom_call.1} parent=15 // pred_check
          %p646 = pneg %p355
        $region62: #{tpu_custom_call.1} parent=15 // pred_check_branch
          %648 = sbr.rel (%p646) target = $region64
        $region63: #{tpu_custom_call.1} parent=15 // pred_region
          %p649 = scmp.lt.s32.totalorder %s45, 1
          %s650 = scalar_select %p649, %s45, 1
          %s651 = scalar_lea.vmem %s11, %s650
        $region64: #{tpu_custom_call.1} parent=15 // pred_fallthru
          _
        // Predicated region
        $region65: #{tpu_custom_call.1} parent=15 // pred_check
          %p652 = pneg %p381
        $region66: #{tpu_custom_call.1} parent=15 // pred_check_branch
          %654 = sbr.rel (%p652) target = $region68
        $region67: #{tpu_custom_call.1} parent=15 // pred_region
          %p655 = scmp.lt.s32.totalorder %s45, 1
          %s656 = scalar_select %p655, %s45, 1
          %s657 = smul.addr %s656, 8
          %s658 = smul.addr %s657, 8
          %s659 = scalar_lea.vmem %s12, %s658
        $region68: #{tpu_custom_call.1} parent=15 // pred_fallthru
          _
        // Predicated region
        $region69: #{tpu_custom_call.1} parent=15 // pred_check
          %p660 = pneg %p407
        $region70: #{tpu_custom_call.1} parent=15 // pred_check_branch
          %662 = sbr.rel (%p660) target = $region72
        $region71: #{tpu_custom_call.1} parent=15 // pred_region
          %p663 = scmp.lt.s32.totalorder %s45, 1
          %s664 = scalar_select %p663, %s45, 1
          %s665 = scalar_lea.vmem %s13, %s664
        $region72: #{tpu_custom_call.1} parent=15 // pred_fallthru
          _
        // Predicated region
        $region73: #{tpu_custom_call.1} parent=15 // pred_check
          %p666 = pneg %p433
        $region74: #{tpu_custom_call.1} parent=15 // pred_check_branch
          %668 = sbr.rel (%p666) target = $region76
        $region75: #{tpu_custom_call.1} parent=15 // pred_region
          %s669 = sand.u32 %s423, 1
          %s670 = scalar_lea.sflag [#allocation13], %s669
          %s671 = sand.u32 %s423, 1
          %s672 = scalar_lea.vmem [#allocation12], %s671
          %674 = vsyncadd %s670, 0
          %s675 = scalar_lea.hbm %s14, %s45
          %s677 = sshll.u32 %s675, 4
          %s678 = int_to_ptr.hbm [resolvable:$true] %s677
          %s679 = sshll.u32 %s672, 4
          %s680 = int_to_ptr.vmem [resolvable:$true] %s679
          %682 = dma.hbm_to_vmem [thread:$0]  %s678, 16, %s680, %s670
        $region76: #{tpu_custom_call.1} parent=15 // pred_fallthru
          _
        // Predicated region
        $region77: #{tpu_custom_call.1} parent=15 // pred_check
          %p683 = pneg %p459
        $region78: #{tpu_custom_call.1} parent=15 // pred_check_branch
          %685 = sbr.rel (%p683) target = $region80
        $region79: #{tpu_custom_call.1} parent=15 // pred_region
          %p686 = scmp.lt.s32.totalorder %s45, 1
          %s687 = scalar_select %p686, %s45, 1
          %s688 = scalar_lea.vmem %s15, %s687
        $region80: #{tpu_custom_call.1} parent=15 // pred_fallthru
          _
      $region16: #{tpu_custom_call.1} parent=5 // pred_fallthru
        _
      %p689 = scmp.le.s32.totalorder 1, %s37
      %p690 = scmp.lt.s32.totalorder %s37, 5
      %p691 = pnand %p689, %p690
      %p692 = pneg %p691
      // Predicated region
      $region81: #{tpu_custom_call.1} parent=5 // pred_check
        _
      $region82: #{tpu_custom_call.1} parent=5 // pred_check_branch
        %694 = sbr.rel (%p691) target = $region84
      $region83: #{tpu_custom_call.1} parent=5 // pred_region
        %s695 = ssub.s32 %s37, 1
        %s696 = sand.u32 %s62, 1
        %s697 = scalar_lea.sflag [#allocation4], %s696
        %s698 = sand.u32 %s62, 1
        %s699 = smul.addr %s698, 8
        %s700 = scalar_lea.vmem [#allocation3], %s699
        // Predicated region
        $region85: #{tpu_custom_call.1} parent=83 // pred_check
          %p701 = pneg %p75
        $region86: #{tpu_custom_call.1} parent=83 // pred_check_branch
          %703 = sbr.rel (%p701) target = $region88
        $region87: #{tpu_custom_call.1} parent=83 // pred_region
          %705 = dma.done %s697, 128
        $region88: #{tpu_custom_call.1} parent=83 // pred_fallthru
          _
        %s706 = sand.u32 %s42, 1
        %s707 = scalar_lea.sflag [#allocation7], %s706
        %s708 = sand.u32 %s88, 1
        %s709 = smul.addr %s708, 8
        %s710 = scalar_lea.vmem [#allocation6], %s709
        // Predicated region
        $region89: #{tpu_custom_call.1} parent=83 // pred_check
          %p711 = pneg %p101
        $region90: #{tpu_custom_call.1} parent=83 // pred_check_branch
          %713 = sbr.rel (%p711) target = $region92
        $region91: #{tpu_custom_call.1} parent=83 // pred_region
          %715 = dma.done %s707, 128
        $region92: #{tpu_custom_call.1} parent=83 // pred_fallthru
          _
        %s716 = sand.u32 %s42, 1
        %s717 = scalar_lea.sflag [#allocation7], %s716
        %s718 = sand.u32 %s192, 1
        %s719 = scalar_lea.vmem [#allocation8], %s718
        // Predicated region
        $region93: #{tpu_custom_call.1} parent=83 // pred_check
          %p720 = pneg %p205
        $region94: #{tpu_custom_call.1} parent=83 // pred_check_branch
          %722 = sbr.rel (%p720) target = $region96
        $region95: #{tpu_custom_call.1} parent=83 // pred_region
          %724 = dma.done %s717, 16
        $region96: #{tpu_custom_call.1} parent=83 // pred_fallthru
          _
        %s725 = sand.u32 %s42, 1
        %s726 = scalar_lea.sflag [#allocation10], %s725
        %s727 = sand.u32 %s270, 1
        %s728 = scalar_lea.vmem [#allocation9], %s727
        // Predicated region
        $region97: #{tpu_custom_call.1} parent=83 // pred_check
          %p729 = pneg %p283
        $region98: #{tpu_custom_call.1} parent=83 // pred_check_branch
          %731 = sbr.rel (%p729) target = $region100
        $region99: #{tpu_custom_call.1} parent=83 // pred_region
          %733 = dma.done %s726, 16
        $region100: #{tpu_custom_call.1} parent=83 // pred_fallthru
          _
        %s734 = sand.u32 %s42, 1
        %s735 = scalar_lea.sflag [#allocation10], %s734
        %s736 = sand.u32 %s322, 1
        %s737 = smul.addr %s736, 32
        %s738 = scalar_lea.vmem [#allocation11], %s737
        // Predicated region
        $region101: #{tpu_custom_call.1} parent=83 // pred_check
          %p739 = pneg %p335
        $region102: #{tpu_custom_call.1} parent=83 // pred_check_branch
          %741 = sbr.rel (%p739) target = $region104
        $region103: #{tpu_custom_call.1} parent=83 // pred_region
          %743 = dma.done %s735, 512
        $region104: #{tpu_custom_call.1} parent=83 // pred_fallthru
          _
        %s744 = sand.u32 %s426, 1
        %s745 = scalar_lea.sflag [#allocation13], %s744
        %s746 = sand.u32 %s426, 1
        %s747 = scalar_lea.vmem [#allocation12], %s746
        // Predicated region
        $region105: #{tpu_custom_call.1} parent=83 // pred_check
          %p748 = pneg %p439
        $region106: #{tpu_custom_call.1} parent=83 // pred_check_branch
          %750 = sbr.rel (%p748) target = $region108
        $region107: #{tpu_custom_call.1} parent=83 // pred_region
          %752 = dma.done %s745, 16
        $region108: #{tpu_custom_call.1} parent=83 // pred_fallthru
          _
        %s753 = sand.u32 %s62, 1
        %s754 = scalar_lea.sflag [#allocation4], %s753
        %s755 = sand.u32 %s62, 1
        %s756 = smul.addr %s755, 8
        %s757 = scalar_lea.vmem [#allocation3], %s756
        %p758 = pneg %p75
        %p759 = pneg %p72
        %s760 = sand.u32 %s42, 1
        %s761 = scalar_lea.sflag [#allocation7], %s760
        %s762 = sand.u32 %s88, 1
        %s763 = smul.addr %s762, 8
        %s764 = scalar_lea.vmem [#allocation6], %s763
        %p765 = pneg %p101
        %p766 = pneg %p98
        %p767 = scmp.lt.s32.totalorder %s47, 1
        %s768 = scalar_select %p767, %s47, 1
        %s769 = smul.addr %s768, 4
        %s770 = smul.addr %s769, 8
        %s771 = scalar_lea.vmem %s2, %s770
        %p772 = pneg %p127
        %p773 = pneg %p124
        %p774 = scmp.lt.s32.totalorder %s47, 1
        %s775 = scalar_select %p774, %s47, 1
        %s776 = scalar_lea.vmem %s3, %s775
        %p777 = pneg %p153
        %p778 = pneg %p150
        %p779 = scmp.lt.s32.totalorder %s47, 1
        %s780 = scalar_select %p779, %s47, 1
        %s781 = smul.addr %s780, 4
        %s782 = smul.addr %s781, 8
        %s783 = scalar_lea.vmem %s4, %s782
        %p784 = pneg %p179
        %p785 = pneg %p176
        %s786 = sand.u32 %s42, 1
        %s787 = scalar_lea.sflag [#allocation7], %s786
        %s788 = sand.u32 %s192, 1
        %s789 = scalar_lea.vmem [#allocation8], %s788
        %p790 = pneg %p205
        %p791 = pneg %p202
        %p792 = scmp.lt.s32.totalorder %s47, 1
        %s793 = scalar_select %p792, %s47, 1
        %s794 = smul.addr %s793, 4
        %s795 = smul.addr %s794, 8
        %s796 = scalar_lea.vmem %s6, %s795
        %p797 = pneg %p231
        %p798 = pneg %p228
        %p799 = scmp.lt.s32.totalorder %s47, 1
        %s800 = scalar_select %p799, %s47, 1
        %s801 = scalar_lea.vmem %s7, %s800
        %p802 = pneg %p257
        %p803 = pneg %p254
        %s804 = sand.u32 %s42, 1
        %s805 = scalar_lea.sflag [#allocation10], %s804
        %s806 = sand.u32 %s270, 1
        %s807 = scalar_lea.vmem [#allocation9], %s806
        %p808 = pneg %p283
        %p809 = pneg %p280
        %p810 = scmp.lt.s32.totalorder %s47, 1
        %s811 = scalar_select %p810, %s47, 1
        %s812 = scalar_lea.vmem %s9, %s811
        %p813 = pneg %p309
        %p814 = pneg %p306
        %s815 = sand.u32 %s42, 1
        %s816 = scalar_lea.sflag [#allocation10], %s815
        %s817 = sand.u32 %s322, 1
        %s818 = smul.addr %s817, 32
        %s819 = scalar_lea.vmem [#allocation11], %s818
        %p820 = pneg %p335
        %p821 = pneg %p332
        %p822 = scmp.lt.s32.totalorder %s47, 1
        %s823 = scalar_select %p822, %s47, 1
        %s824 = scalar_lea.vmem %s11, %s823
        %p825 = pneg %p361
        %p826 = pneg %p358
        %p827 = scmp.lt.s32.totalorder %s47, 1
        %s828 = scalar_select %p827, %s47, 1
        %s829 = smul.addr %s828, 8
        %s830 = smul.addr %s829, 8
        %s831 = scalar_lea.vmem %s12, %s830
        %p832 = pneg %p387
        %p833 = pneg %p384
        %p834 = scmp.lt.s32.totalorder %s47, 1
        %s835 = scalar_select %p834, %s47, 1
        %s836 = scalar_lea.vmem %s13, %s835
        %p837 = pneg %p413
        %p838 = pneg %p410
        %s839 = sand.u32 %s426, 1
        %s840 = scalar_lea.sflag [#allocation13], %s839
        %s841 = sand.u32 %s426, 1
        %s842 = scalar_lea.vmem [#allocation12], %s841
        %p843 = pneg %p439
        %p844 = pneg %p436
        %p845 = scmp.lt.s32.totalorder %s47, 1
        %s846 = scalar_select %p845, %s47, 1
        %s847 = scalar_lea.vmem %s15, %s846
        %p848 = pneg %p465
        %p849 = pneg %p462
        %p850 = pneg %p491
        %p851 = pneg %p488
        %s852 = sand.u32 %s478, 1
        %s853 = scalar_lea.sflag [#allocation5], %s852
        %s854 = sand.u32 %s478, 1
        %s855 = smul.addr %s854, 8
        %s856 = scalar_lea.vmem [#allocation14], %s855
        %p857 = scmp.lt.s32.totalorder %s47, 1
        %s858 = scalar_select %p857, %s47, 1
        %s859 = smul.addr %s858, 4
        %s860 = smul.addr %s859, 8
        %s861 = scalar_lea.vmem %s2, %s860
        %p862 = scmp.lt.s32.totalorder %s47, 1
        %s863 = scalar_select %p862, %s47, 1
        %s864 = scalar_lea.vmem %s3, %s863
        %p865 = scmp.lt.s32.totalorder %s47, 1
        %s866 = scalar_select %p865, %s47, 1
        %s867 = smul.addr %s866, 4
        %s868 = smul.addr %s867, 8
        %s869 = scalar_lea.vmem %s4, %s868
        %p870 = scmp.lt.s32.totalorder %s47, 1
        %s871 = scalar_select %p870, %s47, 1
        %s872 = smul.addr %s871, 4
        %s873 = smul.addr %s872, 8
        %s874 = scalar_lea.vmem %s6, %s873
        %p875 = scmp.lt.s32.totalorder %s47, 1
        %s876 = scalar_select %p875, %s47, 1
        %s877 = scalar_lea.vmem %s7, %s876
        %p878 = scmp.lt.s32.totalorder %s47, 1
        %s879 = scalar_select %p878, %s47, 1
        %s880 = scalar_lea.vmem %s9, %s879
        %p881 = scmp.lt.s32.totalorder %s47, 1
        %s882 = scalar_select %p881, %s47, 1
        %s883 = scalar_lea.vmem %s11, %s882
        %p884 = scmp.lt.s32.totalorder %s47, 1
        %s885 = scalar_select %p884, %s47, 1
        %s886 = smul.addr %s885, 8
        %s887 = smul.addr %s886, 8
        %s888 = scalar_lea.vmem %s12, %s887
        %p889 = scmp.lt.s32.totalorder %s47, 1
        %s890 = scalar_select %p889, %s47, 1
        %s891 = scalar_lea.vmem %s13, %s890
        %p892 = scmp.lt.s32.totalorder %s47, 1
        %s893 = scalar_select %p892, %s47, 1
        %s894 = scalar_lea.vmem %s15, %s893
        %p895 = scmp.eq.s32.totalorder %s47, 0
        // Predicated region
        $region109: #{tpu_custom_call.1} parent=83 // pred_check
          %p896 = pneg %p895
        $region110: #{tpu_custom_call.1} parent=83 // pred_check_branch
          %898 = sbr.rel (%p896) target = $region112
        $region111: #{tpu_custom_call.1} parent=83 // pred_region
          %v899 = vld [vmem:[%s700] sm:$0xff]
          %vm900 = vcmask 261120
          %901 = vst.msk [vmem:[#allocation2] sm:$0xff] %vm900, %v899
        $region112: #{tpu_custom_call.1} parent=83 // pred_fallthru
          _
        %v902 = vld [vmem:[#allocation2] sm:$0xff]
        %v903 = vld [vmem:[%s710] sm:$0xff]
        %v904 = vadd.f32 %v902, %v903
        %v905 = vld [vmem:[%s861] sm:$0xff]
        %v906 = vld [vmem:[%s861 + $0x8] sm:$0xff]
        %v907 = vld [vmem:[%s861 + $0x10] sm:$0xff]
        %v908 = vld [vmem:[%s861 + $0x18] sm:$0xff]
        %v909 = vld [vmem:[%s864] sm:$0x1]
        %v911 = vperm.slane %v909, 0
        %vm913 = vcmask 261120
        %v915 = vsel %vm913, %v904, 0
        %917 = vmatpush.msra.mxu0 0.0
        %918 = vmatpush.msra.mxu0 0.0
        %919 = vmatpush.msra.mxu0 0.0
        %920 = vmatpush.msra.mxu0 0.0
        %921 = vmatpush.msra.mxu0 0.0
        %922 = vmatpush.msra.mxu0 0.0
        %923 = vmatpush.msra.mxu0 0.0
        %924 = vmatpush.msra.mxu0 0.0
        %925 = vmatpush.msra.mxu0 0.0
        %926 = vmatpush.msra.mxu0 0.0
        %927 = vmatpush.msra.mxu0 0.0
        %928 = vmatpush.msra.mxu0 0.0
        %929 = vmatpush.msra.mxu0 %v908
        %930 = vmatpush.msra.mxu0 %v907
        %931 = vmatpush.msra.mxu0 %v906
        %932 = vmatpush.msra.mxu0 %v905
        %933 = vmatmul.f32.gmra.mxu0 %v915
        %v934 = vpop.f32.mrf.mxu0
        %v935 = vadd.f32 %v911, %v934
        %936 = vdwg.mxu0
        %v937 = vld [vmem:[%s869] sm:$0xff]
        %v938 = vld [vmem:[%s869 + $0x8] sm:$0xff]
        %v939 = vld [vmem:[%s869 + $0x10] sm:$0xff]
        %v940 = vld [vmem:[%s869 + $0x18] sm:$0xff]
        %v941 = vld [vmem:[%s719] sm:$0x1]
        %v943 = vperm.slane %v941, 0
        %v946 = vsel %vm913, %v902, 0
        %948 = vmatpush.msra.mxu0 0.0
        %949 = vmatpush.msra.mxu0 0.0
        %950 = vmatpush.msra.mxu0 0.0
        %951 = vmatpush.msra.mxu0 0.0
        %952 = vmatpush.msra.mxu0 0.0
        %953 = vmatpush.msra.mxu0 0.0
        %954 = vmatpush.msra.mxu0 0.0
        %955 = vmatpush.msra.mxu0 0.0
        %956 = vmatpush.msra.mxu0 0.0
        %957 = vmatpush.msra.mxu0 0.0
        %958 = vmatpush.msra.mxu0 0.0
        %959 = vmatpush.msra.mxu0 0.0
        %960 = vmatpush.msra.mxu0 %v940
        %961 = vmatpush.msra.mxu0 %v939
        %962 = vmatpush.msra.mxu0 %v938
        %963 = vmatpush.msra.mxu0 %v937
        %964 = vmatmul.f32.gmra.mxu0 %v946
        %v965 = vpop.f32.mrf.mxu0
        %v966 = vadd.f32 %v943, %v965
        %967 = vdwg.mxu0
        %969 = vrot.lane.b32.xlu0 %v935, 96
        %v970 = vpop.permute.xlu0 %969
        %vm971 = vcmask 64512
        %v972 = vsel %vm971, %v935, 0
        %v974 = vsel %vm971, %v970, 0
        %976 = vmatpush.xpose.msra.mxu0 0.0
        %977 = vmatpush.xpose.msra.mxu0 0.0
        %978 = vmatpush.xpose.msra.mxu0 0.0
        %979 = vmatpush.xpose.msra.mxu0 0.0
        %980 = vmatpush.xpose.msra.mxu0 0.0
        %981 = vmatpush.xpose.msra.mxu0 0.0
        %982 = vmatpush.xpose.msra.mxu0 0.0
        %983 = vmatpush.xpose.msra.mxu0 0.0
        %984 = vmatpush.xpose.msra.mxu0 0.0
        %985 = vmatpush.xpose.msra.mxu0 0.0
        %986 = vmatpush.xpose.msra.mxu0 0.0
        %987 = vmatpush.xpose.msra.mxu0 0.0
        %988 = vmatpush.xpose.msra.mxu0 0.0
        %989 = vmatpush.xpose.msra.mxu0 0.0
        %990 = vmatpush.xpose.msra.mxu0 0.0
        %991 = vmatpush.xpose.msra.mxu0 %v974
        %992 = vmatmul.f32.gmra.mxu0 %v972
        %v993 = vpop.f32.mrf.mxu0
        %v994 = vadd.f32 0.0, %v993
        %995 = vdwg.mxu0
        %v996 = vsel %vm971, %v994, -inf
        %997 = vmax.xlane.f32.xlu0 %v996
        %v998 = vpop.xlane.xlu0 %997
        %v999 = vsub.f32 %v994, %v998
        %v1000 = vmul.f32 %v999, 1.442695
        %v1001 = vpow.pop %v1000
        %v1002 = vsel %vm971, %v1001, 0.0
        %1003 = vadd.xlane.f32.xlu0 %v1002
        %v1004 = vpop.xlane.xlu0 %1003
        %v1005 = vrcp.pop %v1004
        %v1006 = vmul.f32 %v1001, %v1005
        %v1008 = vsel %vm971, %v1006, 0
        %1010 = vmatpush.msra.mxu0 0.0
        %1011 = vmatpush.msra.mxu0 0.0
        %1012 = vmatpush.msra.mxu0 0.0
        %1013 = vmatpush.msra.mxu0 0.0
        %1014 = vmatpush.msra.mxu0 0.0
        %1015 = vmatpush.msra.mxu0 0.0
        %1016 = vmatpush.msra.mxu0 0.0
        %1017 = vmatpush.msra.mxu0 0.0
        %1018 = vmatpush.msra.mxu0 0.0
        %1019 = vmatpush.msra.mxu0 0.0
        %1020 = vmatpush.msra.mxu0 0.0
        %1021 = vmatpush.msra.mxu0 0.0
        %1022 = vmatpush.msra.mxu0 0.0
        %1023 = vmatpush.msra.mxu0 0.0
        %1024 = vmatpush.msra.mxu0 0.0
        %1025 = vmatpush.msra.mxu0 %v966
        %1026 = vmatmul.f32.gmra.mxu0 %v1008
        %v1027 = vpop.f32.mrf.mxu0
        %v1028 = vadd.f32 0.0, %v1027
        %1029 = vdwg.mxu0
        %1030 = vrot.lane.b32.xlu0 %v935, 120
        %v1031 = vpop.permute.xlu0 %1030
        %1032 = vrot.lane.b32.xlu0 %v935, 88
        %v1033 = vpop.permute.xlu0 %1032
        %v1034 = vsel %vm971, %v1031, 0
        %v1036 = vsel %vm971, %v1033, 0
        %1038 = vmatpush.xpose.msra.mxu0 0.0
        %1039 = vmatpush.xpose.msra.mxu0 0.0
        %1040 = vmatpush.xpose.msra.mxu0 0.0
        %1041 = vmatpush.xpose.msra.mxu0 0.0
        %1042 = vmatpush.xpose.msra.mxu0 0.0
        %1043 = vmatpush.xpose.msra.mxu0 0.0
        %1044 = vmatpush.xpose.msra.mxu0 0.0
        %1045 = vmatpush.xpose.msra.mxu0 0.0
        %1046 = vmatpush.xpose.msra.mxu0 0.0
        %1047 = vmatpush.xpose.msra.mxu0 0.0
        %1048 = vmatpush.xpose.msra.mxu0 0.0
        %1049 = vmatpush.xpose.msra.mxu0 0.0
        %1050 = vmatpush.xpose.msra.mxu0 0.0
        %1051 = vmatpush.xpose.msra.mxu0 0.0
        %1052 = vmatpush.xpose.msra.mxu0 0.0
        %1053 = vmatpush.xpose.msra.mxu0 %v1036
        %1054 = vmatmul.f32.gmra.mxu0 %v1034
        %v1055 = vpop.f32.mrf.mxu0
        %v1056 = vadd.f32 0.0, %v1055
        %1057 = vdwg.mxu0
        %v1058 = vsel %vm971, %v1056, -inf
        %1059 = vmax.xlane.f32.xlu0 %v1058
        %v1060 = vpop.xlane.xlu0 %1059
        %v1061 = vsub.f32 %v1056, %v1060
        %v1062 = vmul.f32 %v1061, 1.442695
        %v1063 = vpow.pop %v1062
        %v1064 = vsel %vm971, %v1063, 0.0
        %1065 = vadd.xlane.f32.xlu0 %v1064
        %v1066 = vpop.xlane.xlu0 %1065
        %v1067 = vrcp.pop %v1066
        %v1068 = vmul.f32 %v1063, %v1067
        %1070 = vrot.lane.b32.xlu0 %v966, 120
        %v1071 = vpop.permute.xlu0 %1070
        %v1074 = vsel %vm971, %v1068, 0
        %1076 = vmatpush.msra.mxu0 0.0
        %1077 = vmatpush.msra.mxu0 0.0
        %1078 = vmatpush.msra.mxu0 0.0
        %1079 = vmatpush.msra.mxu0 0.0
        %1080 = vmatpush.msra.mxu0 0.0
        %1081 = vmatpush.msra.mxu0 0.0
        %1082 = vmatpush.msra.mxu0 0.0
        %1083 = vmatpush.msra.mxu0 0.0
        %1084 = vmatpush.msra.mxu0 0.0
        %1085 = vmatpush.msra.mxu0 0.0
        %1086 = vmatpush.msra.mxu0 0.0
        %1087 = vmatpush.msra.mxu0 0.0
        %1088 = vmatpush.msra.mxu0 0.0
        %1089 = vmatpush.msra.mxu0 0.0
        %1090 = vmatpush.msra.mxu0 0.0
        %1091 = vmatpush.msra.mxu0 %v1071
        %1092 = vmatmul.f32.gmra.mxu0 %v1074
        %v1093 = vpop.f32.mrf.mxu0
        %v1094 = vadd.f32 0.0, %v1093
        %1095 = vdwg.mxu0
        %1096 = vrot.lane.b32.xlu0 %v935, 112
        %v1097 = vpop.permute.xlu0 %1096
        %1098 = vrot.lane.b32.xlu0 %v935, 80
        %v1099 = vpop.permute.xlu0 %1098
        %v1100 = vsel %vm971, %v1097, 0
        %v1102 = vsel %vm971, %v1099, 0
        %1104 = vmatpush.xpose.msra.mxu0 0.0
        %1105 = vmatpush.xpose.msra.mxu0 0.0
        %1106 = vmatpush.xpose.msra.mxu0 0.0
        %1107 = vmatpush.xpose.msra.mxu0 0.0
        %1108 = vmatpush.xpose.msra.mxu0 0.0
        %1109 = vmatpush.xpose.msra.mxu0 0.0
        %1110 = vmatpush.xpose.msra.mxu0 0.0
        %1111 = vmatpush.xpose.msra.mxu0 0.0
        %1112 = vmatpush.xpose.msra.mxu0 0.0
        %1113 = vmatpush.xpose.msra.mxu0 0.0
        %1114 = vmatpush.xpose.msra.mxu0 0.0
        %1115 = vmatpush.xpose.msra.mxu0 0.0
        %1116 = vmatpush.xpose.msra.mxu0 0.0
        %1117 = vmatpush.xpose.msra.mxu0 0.0
        %1118 = vmatpush.xpose.msra.mxu0 0.0
        %1119 = vmatpush.xpose.msra.mxu0 %v1102
        %1120 = vmatmul.f32.gmra.mxu0 %v1100
        %v1121 = vpop.f32.mrf.mxu0
        %v1122 = vadd.f32 0.0, %v1121
        %1123 = vdwg.mxu0
        %v1124 = vsel %vm971, %v1122, -inf
        %1125 = vmax.xlane.f32.xlu0 %v1124
        %v1126 = vpop.xlane.xlu0 %1125
        %v1127 = vsub.f32 %v1122, %v1126
        %v1128 = vmul.f32 %v1127, 1.442695
        %v1129 = vpow.pop %v1128
        %v1130 = vsel %vm971, %v1129, 0.0
        %1131 = vadd.xlane.f32.xlu0 %v1130
        %v1132 = vpop.xlane.xlu0 %1131
        %v1133 = vrcp.pop %v1132
        %v1134 = vmul.f32 %v1129, %v1133
        %1135 = vrot.lane.b32.xlu0 %v966, 112
        %v1136 = vpop.permute.xlu0 %1135
        %v1139 = vsel %vm971, %v1134, 0
        %1141 = vmatpush.msra.mxu0 0.0
        %1142 = vmatpush.msra.mxu0 0.0
        %1143 = vmatpush.msra.mxu0 0.0
        %1144 = vmatpush.msra.mxu0 0.0
        %1145 = vmatpush.msra.mxu0 0.0
        %1146 = vmatpush.msra.mxu0 0.0
        %1147 = vmatpush.msra.mxu0 0.0
        %1148 = vmatpush.msra.mxu0 0.0
        %1149 = vmatpush.msra.mxu0 0.0
        %1150 = vmatpush.msra.mxu0 0.0
        %1151 = vmatpush.msra.mxu0 0.0
        %1152 = vmatpush.msra.mxu0 0.0
        %1153 = vmatpush.msra.mxu0 0.0
        %1154 = vmatpush.msra.mxu0 0.0
        %1155 = vmatpush.msra.mxu0 0.0
        %1156 = vmatpush.msra.mxu0 %v1136
        %1157 = vmatmul.f32.gmra.mxu0 %v1139
        %v1158 = vpop.f32.mrf.mxu0
        %v1159 = vadd.f32 0.0, %v1158
        %1160 = vdwg.mxu0
        %1161 = vrot.lane.b32.xlu0 %v935, 104
        %v1162 = vpop.permute.xlu0 %1161
        %1163 = vrot.lane.b32.xlu0 %v935, 72
        %v1164 = vpop.permute.xlu0 %1163
        %v1165 = vsel %vm971, %v1162, 0
        %v1167 = vsel %vm971, %v1164, 0
        %1169 = vmatpush.xpose.msra.mxu0 0.0
        %1170 = vmatpush.xpose.msra.mxu0 0.0
        %1171 = vmatpush.xpose.msra.mxu0 0.0
        %1172 = vmatpush.xpose.msra.mxu0 0.0
        %1173 = vmatpush.xpose.msra.mxu0 0.0
        %1174 = vmatpush.xpose.msra.mxu0 0.0
        %1175 = vmatpush.xpose.msra.mxu0 0.0
        %1176 = vmatpush.xpose.msra.mxu0 0.0
        %1177 = vmatpush.xpose.msra.mxu0 0.0
        %1178 = vmatpush.xpose.msra.mxu0 0.0
        %1179 = vmatpush.xpose.msra.mxu0 0.0
        %1180 = vmatpush.xpose.msra.mxu0 0.0
        %1181 = vmatpush.xpose.msra.mxu0 0.0
        %1182 = vmatpush.xpose.msra.mxu0 0.0
        %1183 = vmatpush.xpose.msra.mxu0 0.0
        %1184 = vmatpush.xpose.msra.mxu0 %v1167
        %1185 = vmatmul.f32.gmra.mxu0 %v1165
        %v1186 = vpop.f32.mrf.mxu0
        %v1187 = vadd.f32 0.0, %v1186
        %1188 = vdwg.mxu0
        %v1189 = vsel %vm971, %v1187, -inf
        %1190 = vmax.xlane.f32.xlu0 %v1189
        %v1191 = vpop.xlane.xlu0 %1190
        %v1192 = vsub.f32 %v1187, %v1191
        %v1193 = vmul.f32 %v1192, 1.442695
        %v1194 = vpow.pop %v1193
        %v1195 = vsel %vm971, %v1194, 0.0
        %1196 = vadd.xlane.f32.xlu0 %v1195
        %v1197 = vpop.xlane.xlu0 %1196
        %v1198 = vrcp.pop %v1197
        %v1199 = vmul.f32 %v1194, %v1198
        %1200 = vrot.lane.b32.xlu0 %v966, 104
        %v1201 = vpop.permute.xlu0 %1200
        %v1204 = vsel %vm971, %v1199, 0
        %1206 = vmatpush.msra.mxu0 0.0
        %1207 = vmatpush.msra.mxu0 0.0
        %1208 = vmatpush.msra.mxu0 0.0
        %1209 = vmatpush.msra.mxu0 0.0
        %1210 = vmatpush.msra.mxu0 0.0
        %1211 = vmatpush.msra.mxu0 0.0
        %1212 = vmatpush.msra.mxu0 0.0
        %1213 = vmatpush.msra.mxu0 0.0
        %1214 = vmatpush.msra.mxu0 0.0
        %1215 = vmatpush.msra.mxu0 0.0
        %1216 = vmatpush.msra.mxu0 0.0
        %1217 = vmatpush.msra.mxu0 0.0
        %1218 = vmatpush.msra.mxu0 0.0
        %1219 = vmatpush.msra.mxu0 0.0
        %1220 = vmatpush.msra.mxu0 0.0
        %1221 = vmatpush.msra.mxu0 %v1201
        %1222 = vmatmul.f32.gmra.mxu0 %v1204
        %v1223 = vpop.f32.mrf.mxu0
        %v1224 = vadd.f32 0.0, %v1223
        %1225 = vdwg.mxu0
        %1227 = vrot.lane.b32.xlu0 %v1094, 8
        %v1228 = vpop.permute.xlu0 %1227
        %1231 = vrot.lane.b32.xlu0 %v1159, 16
        %v1232 = vpop.permute.xlu0 %1231
        %1235 = vrot.lane.b32.xlu0 %v1224, 24
        %v1236 = vpop.permute.xlu0 %1235
        %v1238 = vsel %vm971, %v1028, %v1228
        %vm1239 = vcmask 130048
        %v1240 = vsel %vm1239, %v1238, %v1232
        %vm1241 = vcmask 195584
        %v1242 = vsel %vm1241, %v1240, %v1236
        %v1243 = vld [vmem:[%s874] sm:$0xff]
        %v1244 = vld [vmem:[%s874 + $0x8] sm:$0xff]
        %v1245 = vld [vmem:[%s874 + $0x10] sm:$0xff]
        %v1246 = vld [vmem:[%s874 + $0x18] sm:$0xff]
        %v1247 = vld [vmem:[%s877] sm:$0x1]
        %v1249 = vperm.slane %v1247, 0
        %v1252 = vsel %vm913, %v1242, 0
        %1254 = vmatpush.msra.mxu0 0.0
        %1255 = vmatpush.msra.mxu0 0.0
        %1256 = vmatpush.msra.mxu0 0.0
        %1257 = vmatpush.msra.mxu0 0.0
        %1258 = vmatpush.msra.mxu0 0.0
        %1259 = vmatpush.msra.mxu0 0.0
        %1260 = vmatpush.msra.mxu0 0.0
        %1261 = vmatpush.msra.mxu0 0.0
        %1262 = vmatpush.msra.mxu0 0.0
        %1263 = vmatpush.msra.mxu0 0.0
        %1264 = vmatpush.msra.mxu0 0.0
        %1265 = vmatpush.msra.mxu0 0.0
        %1266 = vmatpush.msra.mxu0 %v1246
        %1267 = vmatpush.msra.mxu0 %v1245
        %1268 = vmatpush.msra.mxu0 %v1244
        %1269 = vmatpush.msra.mxu0 %v1243
        %1270 = vmatmul.f32.gmra.mxu0 %v1252
        %v1271 = vpop.f32.mrf.mxu0
        %v1272 = vadd.f32 %v1249, %v1271
        %1273 = vdwg.mxu0
        %v1274 = vadd.f32 %v902, %v1272
        %v1275 = vld [vmem:[%s728] sm:$0x1]
        %v1276 = vld [vmem:[%s880] sm:$0x1]
        %v1277 = vsel %vm913, %v1274, 0.0
        %1278 = vadd.xlane.f32.xlu0 %v1277
        %v1279 = vpop.xlane.xlu0 %1278
        %v1280 = vrcp.pop 32.0
        %v1281 = vmul.f32 32.0, %v1280
        %v1282 = vsub.f32 1.0, %v1281
        %v1283 = vmul.f32 %v1280, %v1282
        %v1284 = vadd.f32 %v1280, %v1283
        %vm1285 = vweird.f32 %v1280
        %v1286 = vsel %vm1285, %v1280, %v1284
        %v1287 = vmul.f32 %v1279, %v1286
        %v1288 = vsub.f32 %v1274, %v1287
        %v1289 = vmul.f32 %v1288, %v1288
        %v1290 = vsel %vm913, %v1289, 0.0
        %1291 = vadd.xlane.f32.xlu0 %v1290
        %v1292 = vpop.xlane.xlu0 %1291
        %v1293 = vmul.f32 %v1292, %v1286
        %v1294 = vadd.f32 %v1293, 1e-05
        %v1295 = vrsqrt.pop %v1294
        %v1296 = vmul.f32 %v1295, %v1294
        %v1297 = vmul.f32 %v1296, %v1295
        %v1298 = vmul.f32 0.5, %v1297
        %v1299 = vsub.f32 1.5, %v1298
        %v1300 = vmul.f32 %v1295, %v1299
        %vm1301 = vweird.f32 %v1294
        %vm1302 = vweird.f32 %v1295
        %vm1303 = vmor %vm1301, %vm1302
        %v1304 = vsel %vm1303, %v1295, %v1300
        %v1305 = vmul.f32 %v1288, %v1304
        %v1307 = vperm.slane %v1275, 0
        %v1309 = vmul.f32 %v1305, %v1307
        %v1311 = vperm.slane %v1276, 0
        %v1313 = vadd.f32 %v1309, %v1311
        %v1314 = vld [vmem:[%s738] sm:$0xff]
        %v1315 = vld [vmem:[%s738 + $0x8] sm:$0xff]
        %v1316 = vld [vmem:[%s738 + $0x10] sm:$0xff]
        %v1317 = vld [vmem:[%s738 + $0x18] sm:$0xff]
        %v1318 = vld [vmem:[%s883] sm:$0x1]
        %v1320 = vperm.slane %v1318, 0
        %v1323 = vsel %vm913, %v1313, 0
        %1325 = vmatpush.msra.mxu0 0.0
        %1326 = vmatpush.msra.mxu0 0.0
        %1327 = vmatpush.msra.mxu0 0.0
        %1328 = vmatpush.msra.mxu0 0.0
        %1329 = vmatpush.msra.mxu0 0.0
        %1330 = vmatpush.msra.mxu0 0.0
        %1331 = vmatpush.msra.mxu0 0.0
        %1332 = vmatpush.msra.mxu0 0.0
        %1333 = vmatpush.msra.mxu0 0.0
        %1334 = vmatpush.msra.mxu0 0.0
        %1335 = vmatpush.msra.mxu0 0.0
        %1336 = vmatpush.msra.mxu0 0.0
        %1337 = vmatpush.msra.mxu0 %v1317
        %1338 = vmatpush.msra.mxu0 %v1316
        %1339 = vmatpush.msra.mxu0 %v1315
        %1340 = vmatpush.msra.mxu0 %v1314
        %1341 = vmatmul.f32.gmra.mxu0 %v1323
        %v1342 = vpop.f32.mrf.mxu0
        %v1343 = vadd.f32 %v1320, %v1342
        %1344 = vdwg.mxu0
        %v1345 = vmax.f32 %v1343, 0.0
        %v1346 = vld [vmem:[%s888] sm:$0xff]
        %v1347 = vld [vmem:[%s888 + $0x8] sm:$0xff]
        %v1348 = vld [vmem:[%s888 + $0x10] sm:$0xff]
        %v1349 = vld [vmem:[%s888 + $0x18] sm:$0xff]
        %v1350 = vld [vmem:[%s888 + $0x20] sm:$0xff]
        %v1351 = vld [vmem:[%s888 + $0x28] sm:$0xff]
        %v1352 = vld [vmem:[%s888 + $0x30] sm:$0xff]
        %v1353 = vld [vmem:[%s888 + $0x38] sm:$0xff]
        %v1354 = vld [vmem:[%s891] sm:$0x1]
        %v1356 = vperm.slane %v1354, 0
        %vm1358 = vcmask 523264
        %v1360 = vsel %vm1358, %v1345, 0
        %1362 = vmatpush.msra.mxu0 0.0
        %1363 = vmatpush.msra.mxu0 0.0
        %1364 = vmatpush.msra.mxu0 0.0
        %1365 = vmatpush.msra.mxu0 0.0
        %1366 = vmatpush.msra.mxu0 0.0
        %1367 = vmatpush.msra.mxu0 0.0
        %1368 = vmatpush.msra.mxu0 0.0
        %1369 = vmatpush.msra.mxu0 0.0
        %1370 = vmatpush.msra.mxu0 %v1353
        %1371 = vmatpush.msra.mxu0 %v1352
        %1372 = vmatpush.msra.mxu0 %v1351
        %1373 = vmatpush.msra.mxu0 %v1350
        %1374 = vmatpush.msra.mxu0 %v1349
        %1375 = vmatpush.msra.mxu0 %v1348
        %1376 = vmatpush.msra.mxu0 %v1347
        %1377 = vmatpush.msra.mxu0 %v1346
        %1378 = vmatmul.f32.gmra.mxu0 %v1360
        %v1379 = vpop.f32.mrf.mxu0
        %v1380 = vadd.f32 %v1356, %v1379
        %1381 = vdwg.mxu0
        %v1382 = vadd.f32 %v1313, %v1380
        %v1383 = vld [vmem:[%s747] sm:$0x1]
        %v1384 = vld [vmem:[%s894] sm:$0x1]
        %v1385 = vsel %vm913, %v1382, 0.0
        %1386 = vadd.xlane.f32.xlu0 %v1385
        %v1387 = vpop.xlane.xlu0 %1386
        %v1388 = vmul.f32 %v1387, %v1286
        %v1389 = vsub.f32 %v1382, %v1388
        %v1390 = vmul.f32 %v1389, %v1389
        %v1391 = vsel %vm913, %v1390, 0.0
        %1392 = vadd.xlane.f32.xlu0 %v1391
        %v1393 = vpop.xlane.xlu0 %1392
        %v1394 = vmul.f32 %v1393, %v1286
        %v1395 = vadd.f32 %v1394, 1e-05
        %v1396 = vrsqrt.pop %v1395
        %v1397 = vmul.f32 %v1396, %v1395
        %v1398 = vmul.f32 %v1397, %v1396
        %v1399 = vmul.f32 0.5, %v1398
        %v1400 = vsub.f32 1.5, %v1399
        %v1401 = vmul.f32 %v1396, %v1400
        %vm1402 = vweird.f32 %v1395
        %vm1403 = vweird.f32 %v1396
        %vm1404 = vmor %vm1402, %vm1403
        %v1405 = vsel %vm1404, %v1396, %v1401
        %v1406 = vmul.f32 %v1389, %v1405
        %v1408 = vperm.slane %v1383, 0
        %v1410 = vmul.f32 %v1406, %v1408
        %v1412 = vperm.slane %v1384, 0
        %v1414 = vadd.f32 %v1410, %v1412
        %1415 = vst.msk [vmem:[#allocation2] sm:$0xff] %vm913, %v1414
        %p1416 = scmp.eq.s32.totalorder %s47, 1
        // Predicated region
        $region113: #{tpu_custom_call.1} parent=83 // pred_check
          %p1417 = pneg %p1416
        $region114: #{tpu_custom_call.1} parent=83 // pred_check_branch
          %1419 = sbr.rel (%p1417) target = $region116
        $region115: #{tpu_custom_call.1} parent=83 // pred_region
          %1420 = vst.msk [vmem:[%s856] sm:$0xff] %vm913, %v1414
        $region116: #{tpu_custom_call.1} parent=83 // pred_fallthru
          _
        %s1421 = sand.u32 %s478, 1
        %s1422 = scalar_lea.sflag [#allocation5], %s1421
        %s1423 = sand.u32 %s478, 1
        %s1424 = smul.addr %s1423, 8
        %s1425 = scalar_lea.vmem [#allocation14], %s1424
        // Predicated region
        $region117: #{tpu_custom_call.1} parent=83 // pred_check
          %p1426 = pneg %p488
        $region118: #{tpu_custom_call.1} parent=83 // pred_check_branch
          %1428 = sbr.rel (%p1426) target = $region120
        $region119: #{tpu_custom_call.1} parent=83 // pred_region
          %1430 = vsyncadd %s1422, 0
          %s1431 = smul.addr %s46, 8
          %s1432 = scalar_lea.hbm %s16, %s1431
          %s1434 = sshll.u32 %s1425, 4
          %s1435 = int_to_ptr.vmem [resolvable:$true] %s1434
          %s1436 = sshll.u32 %s1432, 4
          %s1437 = int_to_ptr.hbm [resolvable:$true] %s1436
          %1439 = dma.vmem_to_hbm [thread:$0]  %s1435, 128, %s1437, %s1422
        $region120: #{tpu_custom_call.1} parent=83 // pred_fallthru
          _
      $region84: #{tpu_custom_call.1} parent=5 // pred_fallthru
        _
      %p1440 = scmp.le.s32.totalorder 2, %s37
      // Predicated region
      $region121: #{tpu_custom_call.1} parent=5 // pred_check
        %p1441 = pneg %p1440
      $region122: #{tpu_custom_call.1} parent=5 // pred_check_branch
        %1443 = sbr.rel (%p1441) target = $region124
      $region123: #{tpu_custom_call.1} parent=5 // pred_region
        %s1444 = ssub.s32 %s37, 2
        // Predicated region
        $region125: #{tpu_custom_call.1} parent=123 // pred_check
          %p1445 = pneg %p494
        $region126: #{tpu_custom_call.1} parent=123 // pred_check_branch
          %1447 = sbr.rel (%p1445) target = $region128
        $region127: #{tpu_custom_call.1} parent=123 // pred_region
          %s1448 = sand.u32 %s479, 1
          %s1449 = scalar_lea.sflag [#allocation5], %s1448
          %s1450 = sand.u32 %s479, 1
          %s1451 = smul.addr %s1450, 8
          %s1452 = scalar_lea.vmem [#allocation14], %s1451
          %1454 = dma.done %s1449, 128
        $region128: #{tpu_custom_call.1} parent=123 // pred_fallthru
          _
      $region124: #{tpu_custom_call.1} parent=5 // pred_fallthru
        _
    $region6: #{tpu_custom_call.1} parent=1 // loop_footer
      %s41 = sadd.s32 1, %s37
    $region7: #{tpu_custom_call.1} parent=1 // loop_footer_branch
      %36 = sbr.rel target = $region3
    $region8: #{tpu_custom_call.1} parent=1 // loop_exit
      _
    %1455 = vsyncpa [#allocation4], 1
    %s1456 = scalar_lea.sflag [#allocation4], 1
    %1457 = vsyncpa %s1456, 1
    %1458 = vsyncpa [#allocation7], 1
    %s1459 = scalar_lea.sflag [#allocation7], 1
    %1460 = vsyncpa %s1459, 1
    %1461 = vsyncpa [#allocation10], 1
    %s1462 = scalar_lea.sflag [#allocation10], 1
    %1463 = vsyncpa %s1462, 1
    %1464 = vsyncpa [#allocation13], 1
    %s1465 = scalar_lea.sflag [#allocation13], 1
    %1466 = vsyncpa %s1465, 1
    %1467 = vsyncpa [#allocation5], 1
    %s1468 = scalar_lea.sflag [#allocation5], 1
    %1469 = vsyncpa %s1468, 1

</llo_original>
